<compile_context>
chip_gen: v5e
topology: v5e:2x2
jax: 0.10.0
libtpu: 0.0.40
codegen_flags: <defaults>
</compile_context>

<pallas_src>
import functools

import jax
import jax.numpy as jnp
import numpy as np
from jax import lax
from jax.experimental import pallas as pl
from jax.experimental.pallas import tpu as pltpu


# ----------------------------------------------------------------------------
# In-kernel helpers
# ----------------------------------------------------------------------------
def _maxpool2x2(y):
    """2x2 / stride-2 max pool on (B, H, W, C).

    Uses only reshapes + static integer slices + elementwise max (no strided
    value slices), which are the safest-lowering Mosaic ops.
    """
    b, h, w, c = y.shape
    y = y.reshape(b, h, w // 2, 2, c)
    y = jnp.maximum(y[:, :, :, 0, :], y[:, :, :, 1, :])       # (b, h, w/2, c)
    y = y.reshape(b, h // 2, 2, w // 2, c)
    y = jnp.maximum(y[:, :, 0, :, :], y[:, :, 1, :, :])       # (b, h/2, w/2, c)
    return y


# ----------------------------------------------------------------------------
# Fused kernel: B images per grid step, everything VMEM-resident.
# ----------------------------------------------------------------------------
def fused_net_kernel(p1_ref, w1_ref, b1_ref, w2_ref, b2_ref, wfc_ref, bfc_ref,
                     o_ref, pad2_ref, *, B, H, W):
    # p1_ref  : (B*H*W, 27)            bf16  conv1 im2col patches (this block)
    # w1_ref  : (27, C1)               bf16  C1 = 64
    # b1_ref  : (1, C1)                f32
    # w2_ref  : (9*C1, C2)             bf16  C2 = 128
    # b2_ref  : (1, C2)                f32
    # wfc_ref : (C2, Fp)               bf16  Fp = 256 (lane-dense pad of 200)
    # bfc_ref : (1, Fp)                f32
    # o_ref   : (1, B, Fp)             f32
    # pad2_ref: (B, H/2+2, W/2+2, C1)  bf16  VMEM halo scratch for conv2
    C1 = w1_ref.shape[1]
    C2 = w2_ref.shape[1]
    H2, W2 = H // 2, W // 2
    H4, W4 = H2 // 2, W2 // 2

    # ---- conv1: one im2col matmul (M=B*H*W, K=27) + bias + ReLU + pool ------
    a1 = jnp.dot(p1_ref[...], w1_ref[...],
                 preferred_element_type=jnp.float32)           # (B*H*W, C1) f32
    a1 = jnp.maximum(a1 + b1_ref[...], 0.0)
    p1 = _maxpool2x2(a1.reshape(B, H, W, C1))                  # (B, H2, W2, C1)

    # ---- halo (SAME) padding for conv2: zero only the 1-px ring each step ---
    zrow = jnp.zeros((B, 1, W2 + 2, C1), pad2_ref.dtype)
    zcol = jnp.zeros((B, H2 + 2, 1, C1), pad2_ref.dtype)
    pad2_ref[:, 0:1, :, :] = zrow
    pad2_ref[:, H2 + 1:H2 + 2, :, :] = zrow
    pad2_ref[:, :, 0:1, :] = zcol
    pad2_ref[:, :, W2 + 1:W2 + 2, :] = zcol
    pad2_ref[:, 1:H2 + 1, 1:W2 + 1, :] = p1.astype(pad2_ref.dtype)

    # ---- conv2: im2col (lane-dim concat of 9 shifted bf16 views) ------------
    #      -> single K=576 MXU matmul + bias + ReLU + pool
    xp = pad2_ref[...]                                         # (B,H2+2,W2+2,C1)
    cols = [xp[:, dy:dy + H2, dx:dx + W2, :]
            for dy in range(3) for dx in range(3)]
    patch = jnp.concatenate(cols, axis=-1)                     # (B,H2,W2,9*C1)
    a2 = jnp.dot(patch.reshape(B * H2 * W2, 9 * C1), w2_ref[...],
                 preferred_element_type=jnp.float32)           # (B*H2*W2, C2)
    a2 = jnp.maximum(a2 + b2_ref[...], 0.0)
    p2 = _maxpool2x2(a2.reshape(B, H2, W2, C2))                # (B, H4, W4, C2)

    # ---- global average pool + flatten + fc (M=B) + ReLU --------------------
    g = jnp.sum(p2.reshape(B, H4 * W4, C2), axis=1) * (1.0 / (H4 * W4))  # (B,C2)
    out = jnp.dot(g.astype(jnp.bfloat16), wfc_ref[...],
                  preferred_element_type=jnp.float32) + bfc_ref[...]      # (B,Fp)
    o_ref[0] = jnp.maximum(out, 0.0).astype(o_ref.dtype)


def fused_forward(p1, w1m, b1, w2m, b2, wfcm, bfcp, *, B, H, W):
    NHW, K1 = p1.shape
    G = NHW // (B * H * W)                     # grid length (>= 2 when possible)
    C1 = w1m.shape[1]
    C2 = w2m.shape[1]
    Fp = wfcm.shape[1]
    H2, W2 = H // 2, W // 2
    kernel = functools.partial(fused_net_kernel, B=B, H=H, W=W)
    return pl.pallas_call(
        kernel,
        out_shape=jax.ShapeDtypeStruct((G, B, Fp), jnp.float32),
        grid=(G,),
        in_specs=[
            pl.BlockSpec((B * H * W, K1), lambda n: (n, 0)),    # conv1 patches
            pl.BlockSpec((K1, C1), lambda n: (0, 0)),           # w1 (im2col)
            pl.BlockSpec((1, C1), lambda n: (0, 0)),            # b1
            pl.BlockSpec((9 * C1, C2), lambda n: (0, 0)),       # w2 (im2col)
            pl.BlockSpec((1, C2), lambda n: (0, 0)),            # b2
            pl.BlockSpec((C2, Fp), lambda n: (0, 0)),           # fc weight
            pl.BlockSpec((1, Fp), lambda n: (0, 0)),            # fc bias
        ],
        out_specs=pl.BlockSpec((1, B, Fp), lambda n: (n, 0, 0)),
        scratch_shapes=[
            pltpu.VMEM((B, H2 + 2, W2 + 2, C1), jnp.bfloat16),  # conv2 halo pad
        ],
        compiler_params=pltpu.CompilerParams(
            dimension_semantics=("parallel",),
            vmem_limit_bytes=32 * 1024 * 1024),
    )(p1, w1m, b1, w2m, b2, wfcm, bfcp)


# ----------------------------------------------------------------------------
# Public forward pass (input NCHW like PyTorch; conv weights HWIO, fc (in,out))
# ----------------------------------------------------------------------------
def _pick_batch_tile(n):
    # Largest tile that divides N while keeping the grid >= 2 steps (so both
    # v7x TensorCores get work); fall back to 1 image / step.
    for b in (16, 8, 4, 2):
        if n % b == 0 and n // b >= 2:
            return b
    return 1


@jax.jit
def custom_net_forward(x_nchw, w1, b1, w2, b2, wfc, bfc):
    N, C0, H, W = x_nchw.shape
    assert H % 4 == 0 and W % 4 == 0, "two 2x2/2 max pools need H, W % 4 == 0"
    C1 = w1.shape[3]
    C2 = w2.shape[3]
    F = wfc.shape[1]
    Fp = ((F + 127) // 128) * 128              # 200 -> 256 lane-dense FC width
    B = _pick_batch_tile(N)

    # conv1 im2col in the wrapper: tiny, lane-packed, removes the 3-channel
    # lane-sparse layout from the kernel; activations cast once to bf16.
    x = jnp.transpose(x_nchw, (0, 2, 3, 1)).astype(jnp.bfloat16)     # NHWC
    xp = jnp.pad(x, ((0, 0), (1, 1), (1, 1), (0, 0)))
    cols = [xp[:, dy:dy + H, dx:dx + W, :]
            for dy in range(3) for dx in range(3)]
    p1 = jnp.concatenate(cols, axis=-1).reshape(N * H * W, 9 * C0)   # (N*H*W,27)

    # im2col-reshaped bf16 weights; FC padded to a lane-dense width.
    w1m = w1.reshape(9 * C0, C1).astype(jnp.bfloat16)
    w2m = w2.reshape(9 * C1, C2).astype(jnp.bfloat16)
    wfcm = jnp.zeros((C2, Fp), jnp.bfloat16).at[:, :F].set(wfc.astype(jnp.bfloat16))
    bfcp = jnp.zeros((1, Fp), jnp.float32).at[:, :F].set(bfc)

    out = fused_forward(p1, w1m, b1, w2m, b2, wfcm, bfcp, B=B, H=H, W=W)
    return out.reshape(N, Fp)[:, :F]                                 # (N, 200)


# ----------------------------------------------------------------------------
# Pure-JAX reference emulating the kernel's numerics (bf16 matmul operands,
# f32 accumulation) — correctness sanity check only.
# ----------------------------------------------------------------------------
def reference_forward(x_nchw, w1, b1, w2, b2, wfc, bfc):
    def bf(a):
        return a.astype(jnp.bfloat16).astype(jnp.float32)

    dn = ("NHWC", "HWIO", "NHWC")
    x = jnp.transpose(x_nchw, (0, 2, 3, 1))

    def conv_block(x, w, b):
        y = lax.conv_general_dilated(bf(x), bf(w), (1, 1), "SAME",
                                     dimension_numbers=dn)
        y = jnp.maximum(y + b[0], 0.0)
        return lax.reduce_window(y, -jnp.inf, lax.max,
                                 (1, 2, 2, 1), (1, 2, 2, 1), "VALID")

    y = conv_block(x, w1, b1)
    y = conv_block(y, w2, b2)
    pooled = jnp.mean(y, axis=(1, 2))
    return jnp.maximum(bf(pooled) @ bf(wfc) + bfc[0], 0.0)


if __name__ == "__main__":
    key = jax.random.PRNGKey(0)
    k1, k2, k3, k4, k5, k6, kx = jax.random.split(key, 7)

    # deterministic synthetic parameters (shapes from CustomNet.__init__)
    w1 = jax.random.normal(k1, (3, 3, 3, 64), jnp.float32) * 0.10    # conv1 HWIO
    b1 = jax.random.normal(k2, (1, 64), jnp.float32) * 0.10
    w2 = jax.random.normal(k3, (3, 3, 64, 128), jnp.float32) * 0.05  # conv2 HWIO
    b2 = jax.random.normal(k4, (1, 128), jnp.float32) * 0.05
    wfc = jax.random.normal(k5, (128, 200), jnp.float32) * 0.05      # fc1 (in,out)
    bfc = jax.random.normal(k6, (1, 200), jnp.float32) * 0.05

    # small NCHW input consistent with conv1(3, ...)
    x = jax.random.normal(kx, (2, 3, 16, 16), jnp.float32)

    out = jax.block_until_ready(custom_net_forward(x, w1, b1, w2, b2, wfc, bfc))
    assert out.shape == (2, 200), out.shape

    ref = reference_forward(x, w1, b1, w2, b2, wfc, bfc)
    np.testing.assert_allclose(np.asarray(out), np.asarray(ref),
                               rtol=2e-2, atol=2e-2)

    print("KERNEL_OK")
</pallas_src>

<mosaic_0001>
module attributes {stable_mosaic.version = 11 : i64} {
  func.func @fused_net_kernel(%arg0: i32, %arg1: memref<256x27xbf16, #tpu.memory_space<vmem>>, %arg2: memref<27x64xbf16, #tpu.memory_space<vmem>>, %arg3: memref<1x64xf32, #tpu.memory_space<vmem>>, %arg4: memref<576x128xbf16, #tpu.memory_space<vmem>>, %arg5: memref<1x128xf32, #tpu.memory_space<vmem>>, %arg6: memref<128x256xbf16, #tpu.memory_space<vmem>>, %arg7: memref<1x256xf32, #tpu.memory_space<vmem>>, %arg8: memref<1x1x256xf32, #tpu.memory_space<vmem>>, %arg9: memref<1x10x10x64xbf16, #tpu.memory_space<vmem>>) attributes {dimension_semantics = [#tpu.dimension_semantics<parallel>], iteration_bounds = array<i64: 2>, scalar_prefetch = 0 : i64, scratch_operands = 1 : i64, tpu.core_type = #tpu.core_type<tc>, window_params = [{transform_indices = @transform_0, window_bounds = array<i64: 256, 27>}, {pipeline_mode = #tpu.pipeline_mode<synchronous>, transform_indices = @transform_1, window_bounds = array<i64: 27, 64>}, {pipeline_mode = #tpu.pipeline_mode<synchronous>, transform_indices = @transform_2, window_bounds = array<i64: 1, 64>}, {pipeline_mode = #tpu.pipeline_mode<synchronous>, transform_indices = @transform_3, window_bounds = array<i64: 576, 128>}, {pipeline_mode = #tpu.pipeline_mode<synchronous>, transform_indices = @transform_4, window_bounds = array<i64: 1, 128>}, {pipeline_mode = #tpu.pipeline_mode<synchronous>, transform_indices = @transform_5, window_bounds = array<i64: 128, 256>}, {pipeline_mode = #tpu.pipeline_mode<synchronous>, transform_indices = @transform_6, window_bounds = array<i64: 1, 256>}, {transform_indices = @transform_7, window_bounds = array<i64: 1, 1, 256>}]} {
    %c0 = arith.constant 0 : index
    %c0_0 = arith.constant 0 : index
    %0 = vector.load %arg1[%c0, %c0_0] : memref<256x27xbf16, #tpu.memory_space<vmem>>, vector<256x27xbf16>
    %c0_1 = arith.constant 0 : index
    %c0_2 = arith.constant 0 : index
    %1 = vector.load %arg2[%c0_1, %c0_2] : memref<27x64xbf16, #tpu.memory_space<vmem>>, vector<27x64xbf16>
    %cst = arith.constant dense<0.000000e+00> : vector<256x64xf32>
    %2 = tpu.matmul %0, %1, %cst {dimension_numbers = #tpu.dot_dimension_numbers<[1], [0], [0], [1], [0, 0, 1, 1], [], []>} : vector<256x27xbf16>, vector<27x64xbf16>, vector<256x64xf32> -> vector<256x64xf32>
    %c0_3 = arith.constant 0 : index
    %c0_4 = arith.constant 0 : index
    %3 = vector.load %arg3[%c0_3, %c0_4] : memref<1x64xf32, #tpu.memory_space<vmem>>, vector<1x64xf32>
    %4 = vector.broadcast %3 : vector<1x64xf32> to vector<256x64xf32>
    %5 = arith.addf %2, %4 : vector<256x64xf32>
    %cst_5 = arith.constant 0.000000e+00 : f32
    %6 = vector.broadcast %cst_5 : f32 to vector<256x64xf32>
    %7 = arith.maximumf %5, %6 : vector<256x64xf32>
    %8 = vector.shape_cast %7 : vector<256x64xf32> to vector<1x16x16x64xf32>
    %9 = vector.shape_cast %8 : vector<1x16x16x64xf32> to vector<1x16x8x2x64xf32>
    %10 = vector.extract_strided_slice %9 {offsets = [0, 0, 0, 0, 0], sizes = [1, 16, 8, 1, 64], strides = [1, 1, 1, 1, 1]} : vector<1x16x8x2x64xf32> to vector<1x16x8x1x64xf32>
    %11 = vector.shape_cast %10 : vector<1x16x8x1x64xf32> to vector<1x16x8x64xf32>
    %12 = vector.extract_strided_slice %9 {offsets = [0, 0, 0, 1, 0], sizes = [1, 16, 8, 1, 64], strides = [1, 1, 1, 1, 1]} : vector<1x16x8x2x64xf32> to vector<1x16x8x1x64xf32>
    %13 = vector.shape_cast %12 : vector<1x16x8x1x64xf32> to vector<1x16x8x64xf32>
    %14 = arith.maximumf %11, %13 : vector<1x16x8x64xf32>
    %15 = vector.shape_cast %14 : vector<1x16x8x64xf32> to vector<1x8x2x8x64xf32>
    %16 = vector.extract_strided_slice %15 {offsets = [0, 0, 0, 0, 0], sizes = [1, 8, 1, 8, 64], strides = [1, 1, 1, 1, 1]} : vector<1x8x2x8x64xf32> to vector<1x8x1x8x64xf32>
    %17 = vector.shape_cast %16 : vector<1x8x1x8x64xf32> to vector<1x8x8x64xf32>
    %18 = vector.extract_strided_slice %15 {offsets = [0, 0, 1, 0, 0], sizes = [1, 8, 1, 8, 64], strides = [1, 1, 1, 1, 1]} : vector<1x8x2x8x64xf32> to vector<1x8x1x8x64xf32>
    %19 = vector.shape_cast %18 : vector<1x8x1x8x64xf32> to vector<1x8x8x64xf32>
    %20 = arith.maximumf %17, %19 : vector<1x8x8x64xf32>
    %cst_6 = arith.constant 0.000000e+00 : bf16
    %21 = vector.broadcast %cst_6 : bf16 to vector<1x1x10x64xbf16>
    %cst_7 = arith.constant 0.000000e+00 : bf16
    %22 = vector.broadcast %cst_7 : bf16 to vector<1x10x1x64xbf16>
    %c0_8 = arith.constant 0 : index
    %c0_9 = arith.constant 0 : index
    %c0_10 = arith.constant 0 : index
    %c0_11 = arith.constant 0 : index
    %23 = vector.load %arg9[%c0_8, %c0_9, %c0_10, %c0_11] : memref<1x10x10x64xbf16, #tpu.memory_space<vmem>>, vector<1x1x10x64xbf16>
    tpu.vector_store %arg9[%c0_8, %c0_9, %c0_10, %c0_11], %21 {strides = array<i32>} : memref<1x10x10x64xbf16, #tpu.memory_space<vmem>>, vector<1x1x10x64xbf16>,
    %c0_12 = arith.constant 0 : index
    %c9 = arith.constant 9 : index
    %c0_13 = arith.constant 0 : index
    %c0_14 = arith.constant 0 : index
    %24 = vector.load %arg9[%c0_12, %c9, %c0_13, %c0_14] : memref<1x10x10x64xbf16, #tpu.memory_space<vmem>>, vector<1x1x10x64xbf16>
    tpu.vector_store %arg9[%c0_12, %c9, %c0_13, %c0_14], %21 {strides = array<i32>} : memref<1x10x10x64xbf16, #tpu.memory_space<vmem>>, vector<1x1x10x64xbf16>,
    %c0_15 = arith.constant 0 : index
    %c0_16 = arith.constant 0 : index
    %c0_17 = arith.constant 0 : index
    %c0_18 = arith.constant 0 : index
    %25 = vector.load %arg9[%c0_15, %c0_16, %c0_17, %c0_18] : memref<1x10x10x64xbf16, #tpu.memory_space<vmem>>, vector<1x10x1x64xbf16>
    tpu.vector_store %arg9[%c0_15, %c0_16, %c0_17, %c0_18], %22 {strides = array<i32>} : memref<1x10x10x64xbf16, #tpu.memory_space<vmem>>, vector<1x10x1x64xbf16>,
    %c0_19 = arith.constant 0 : index
    %c0_20 = arith.constant 0 : index
    %c9_21 = arith.constant 9 : index
    %c0_22 = arith.constant 0 : index
    %26 = vector.load %arg9[%c0_19, %c0_20, %c9_21, %c0_22] : memref<1x10x10x64xbf16, #tpu.memory_space<vmem>>, vector<1x10x1x64xbf16>
    tpu.vector_store %arg9[%c0_19, %c0_20, %c9_21, %c0_22], %22 {strides = array<i32>} : memref<1x10x10x64xbf16, #tpu.memory_space<vmem>>, vector<1x10x1x64xbf16>,
    %27 = arith.truncf %20 : vector<1x8x8x64xf32> to vector<1x8x8x64xbf16>
    %c0_23 = arith.constant 0 : index
    %c1 = arith.constant 1 : index
    %c1_24 = arith.constant 1 : index
    %c0_25 = arith.constant 0 : index
    %28 = vector.load %arg9[%c0_23, %c1, %c1_24, %c0_25] : memref<1x10x10x64xbf16, #tpu.memory_space<vmem>>, vector<1x8x8x64xbf16>
    tpu.vector_store %arg9[%c0_23, %c1, %c1_24, %c0_25], %27 {strides = array<i32>} : memref<1x10x10x64xbf16, #tpu.memory_space<vmem>>, vector<1x8x8x64xbf16>,
    %c0_26 = arith.constant 0 : index
    %c0_27 = arith.constant 0 : index
    %c0_28 = arith.constant 0 : index
    %c0_29 = arith.constant 0 : index
    %29 = vector.load %arg9[%c0_26, %c0_27, %c0_28, %c0_29] : memref<1x10x10x64xbf16, #tpu.memory_space<vmem>>, vector<1x10x10x64xbf16>
    %30 = vector.extract_strided_slice %29 {offsets = [0, 0, 0, 0], sizes = [1, 8, 8, 64], strides = [1, 1, 1, 1]} : vector<1x10x10x64xbf16> to vector<1x8x8x64xbf16>
    %31 = vector.extract_strided_slice %29 {offsets = [0, 0, 1, 0], sizes = [1, 8, 8, 64], strides = [1, 1, 1, 1]} : vector<1x10x10x64xbf16> to vector<1x8x8x64xbf16>
    %32 = vector.extract_strided_slice %29 {offsets = [0, 0, 2, 0], sizes = [1, 8, 8, 64], strides = [1, 1, 1, 1]} : vector<1x10x10x64xbf16> to vector<1x8x8x64xbf16>
    %33 = vector.extract_strided_slice %29 {offsets = [0, 1, 0, 0], sizes = [1, 8, 8, 64], strides = [1, 1, 1, 1]} : vector<1x10x10x64xbf16> to vector<1x8x8x64xbf16>
    %34 = vector.extract_strided_slice %29 {offsets = [0, 1, 1, 0], sizes = [1, 8, 8, 64], strides = [1, 1, 1, 1]} : vector<1x10x10x64xbf16> to vector<1x8x8x64xbf16>
    %35 = vector.extract_strided_slice %29 {offsets = [0, 1, 2, 0], sizes = [1, 8, 8, 64], strides = [1, 1, 1, 1]} : vector<1x10x10x64xbf16> to vector<1x8x8x64xbf16>
    %36 = vector.extract_strided_slice %29 {offsets = [0, 2, 0, 0], sizes = [1, 8, 8, 64], strides = [1, 1, 1, 1]} : vector<1x10x10x64xbf16> to vector<1x8x8x64xbf16>
    %37 = vector.extract_strided_slice %29 {offsets = [0, 2, 1, 0], sizes = [1, 8, 8, 64], strides = [1, 1, 1, 1]} : vector<1x10x10x64xbf16> to vector<1x8x8x64xbf16>
    %38 = vector.extract_strided_slice %29 {offsets = [0, 2, 2, 0], sizes = [1, 8, 8, 64], strides = [1, 1, 1, 1]} : vector<1x10x10x64xbf16> to vector<1x8x8x64xbf16>
    %39 = tpu.concatenate %30, %31, %32, %33, %34, %35, %36, %37, %38 in 3 : vector<1x8x8x64xbf16>, vector<1x8x8x64xbf16>, vector<1x8x8x64xbf16>, vector<1x8x8x64xbf16>, vector<1x8x8x64xbf16>, vector<1x8x8x64xbf16>, vector<1x8x8x64xbf16>, vector<1x8x8x64xbf16>, vector<1x8x8x64xbf16> -> vector<1x8x8x576xbf16>
    %40 = vector.shape_cast %39 : vector<1x8x8x576xbf16> to vector<64x576xbf16>
    %c0_30 = arith.constant 0 : index
    %c0_31 = arith.constant 0 : index
    %41 = vector.load %arg4[%c0_30, %c0_31] : memref<576x128xbf16, #tpu.memory_space<vmem>>, vector<576x128xbf16>
    %cst_32 = arith.constant dense<0.000000e+00> : vector<64x128xf32>
    %42 = tpu.matmul %40, %41, %cst_32 {dimension_numbers = #tpu.dot_dimension_numbers<[1], [0], [0], [1], [0, 0, 1, 1], [], []>} : vector<64x576xbf16>, vector<576x128xbf16>, vector<64x128xf32> -> vector<64x128xf32>
    %c0_33 = arith.constant 0 : index
    %c0_34 = arith.constant 0 : index
    %43 = vector.load %arg5[%c0_33, %c0_34] : memref<1x128xf32, #tpu.memory_space<vmem>>, vector<1x128xf32>
    %44 = vector.broadcast %43 : vector<1x128xf32> to vector<64x128xf32>
    %45 = arith.addf %42, %44 : vector<64x128xf32>
    %cst_35 = arith.constant 0.000000e+00 : f32
    %46 = vector.broadcast %cst_35 : f32 to vector<64x128xf32>
    %47 = arith.maximumf %45, %46 : vector<64x128xf32>
    %48 = vector.shape_cast %47 : vector<64x128xf32> to vector<1x8x8x128xf32>
    %49 = vector.shape_cast %48 : vector<1x8x8x128xf32> to vector<1x8x4x2x128xf32>
    %50 = vector.extract_strided_slice %49 {offsets = [0, 0, 0, 0, 0], sizes = [1, 8, 4, 1, 128], strides = [1, 1, 1, 1, 1]} : vector<1x8x4x2x128xf32> to vector<1x8x4x1x128xf32>
    %51 = vector.shape_cast %50 : vector<1x8x4x1x128xf32> to vector<1x8x4x128xf32>
    %52 = vector.extract_strided_slice %49 {offsets = [0, 0, 0, 1, 0], sizes = [1, 8, 4, 1, 128], strides = [1, 1, 1, 1, 1]} : vector<1x8x4x2x128xf32> to vector<1x8x4x1x128xf32>
    %53 = vector.shape_cast %52 : vector<1x8x4x1x128xf32> to vector<1x8x4x128xf32>
    %54 = arith.maximumf %51, %53 : vector<1x8x4x128xf32>
    %55 = vector.shape_cast %54 : vector<1x8x4x128xf32> to vector<1x4x2x4x128xf32>
    %56 = vector.extract_strided_slice %55 {offsets = [0, 0, 0, 0, 0], sizes = [1, 4, 1, 4, 128], strides = [1, 1, 1, 1, 1]} : vector<1x4x2x4x128xf32> to vector<1x4x1x4x128xf32>
    %57 = vector.shape_cast %56 : vector<1x4x1x4x128xf32> to vector<1x4x4x128xf32>
    %58 = vector.extract_strided_slice %55 {offsets = [0, 0, 1, 0, 0], sizes = [1, 4, 1, 4, 128], strides = [1, 1, 1, 1, 1]} : vector<1x4x2x4x128xf32> to vector<1x4x1x4x128xf32>
    %59 = vector.shape_cast %58 : vector<1x4x1x4x128xf32> to vector<1x4x4x128xf32>
    %60 = arith.maximumf %57, %59 : vector<1x4x4x128xf32>
    %61 = vector.shape_cast %60 : vector<1x4x4x128xf32> to vector<1x16x128xf32>
    %cst_36 = arith.constant dense<0.000000e+00> : vector<1x128xf32>
    %62 = vector.multi_reduction <add>, %61, %cst_36 [1] : vector<1x16x128xf32> to vector<1x128xf32>
    %cst_37 = arith.constant 6.250000e-02 : f32
    %63 = vector.broadcast %cst_37 : f32 to vector<1x128xf32>
    %64 = arith.mulf %62, %63 : vector<1x128xf32>
    %65 = arith.truncf %64 : vector<1x128xf32> to vector<1x128xbf16>
    %c0_38 = arith.constant 0 : index
    %c0_39 = arith.constant 0 : index
    %66 = vector.load %arg6[%c0_38, %c0_39] : memref<128x256xbf16, #tpu.memory_space<vmem>>, vector<128x256xbf16>
    %cst_40 = arith.constant dense<0.000000e+00> : vector<1x256xf32>
    %67 = tpu.matmul %65, %66, %cst_40 {dimension_numbers = #tpu.dot_dimension_numbers<[1], [0], [0], [1], [0, 0, 1, 1], [], []>} : vector<1x128xbf16>, vector<128x256xbf16>, vector<1x256xf32> -> vector<1x256xf32>
    %c0_41 = arith.constant 0 : index
    %c0_42 = arith.constant 0 : index
    %68 = vector.load %arg7[%c0_41, %c0_42] : memref<1x256xf32, #tpu.memory_space<vmem>>, vector<1x256xf32>
    %69 = arith.addf %67, %68 : vector<1x256xf32>
    %cst_43 = arith.constant 0.000000e+00 : f32
    %70 = vector.broadcast %cst_43 : f32 to vector<1x256xf32>
    %71 = arith.maximumf %69, %70 : vector<1x256xf32>
    %c0_44 = arith.constant 0 : index
    %c0_45 = arith.constant 0 : index
    %c0_46 = arith.constant 0 : index
    %72 = vector.load %arg8[%c0_44, %c0_45, %c0_46] : memref<1x1x256xf32, #tpu.memory_space<vmem>>, vector<1x1x256xf32>
    %73 = vector.shape_cast %72 : vector<1x1x256xf32> to vector<1x256xf32>
    %74 = vector.shape_cast %71 : vector<1x256xf32> to vector<1x1x256xf32>
    tpu.vector_store %arg8[%c0_44, %c0_45, %c0_46], %74 {strides = array<i32>} : memref<1x1x256xf32, #tpu.memory_space<vmem>>, vector<1x1x256xf32>,
    return
  }
  func.func @transform_0(%arg0: i32) -> (i32, i32) {
    %c0_i32 = arith.constant 0 : i32
    %c0_i32_0 = arith.constant 0 : i32
    return %arg0, %c0_i32 : i32, i32
  }
  func.func @transform_1(%arg0: i32) -> (i32, i32) {
    %c0_i32 = arith.constant 0 : i32
    %c0_i32_0 = arith.constant 0 : i32
    %c0_i32_1 = arith.constant 0 : i32
    return %c0_i32, %c0_i32_0 : i32, i32
  }
  func.func @transform_2(%arg0: i32) -> (i32, i32) {
    %c0_i32 = arith.constant 0 : i32
    %c0_i32_0 = arith.constant 0 : i32
    %c0_i32_1 = arith.constant 0 : i32
    return %c0_i32, %c0_i32_0 : i32, i32
  }
  func.func @transform_3(%arg0: i32) -> (i32, i32) {
    %c0_i32 = arith.constant 0 : i32
    %c0_i32_0 = arith.constant 0 : i32
    %c0_i32_1 = arith.constant 0 : i32
    return %c0_i32, %c0_i32_0 : i32, i32
  }
  func.func @transform_4(%arg0: i32) -> (i32, i32) {
    %c0_i32 = arith.constant 0 : i32
    %c0_i32_0 = arith.constant 0 : i32
    %c0_i32_1 = arith.constant 0 : i32
    return %c0_i32, %c0_i32_0 : i32, i32
  }
  func.func @transform_5(%arg0: i32) -> (i32, i32) {
    %c0_i32 = arith.constant 0 : i32
    %c0_i32_0 = arith.constant 0 : i32
    %c0_i32_1 = arith.constant 0 : i32
    return %c0_i32, %c0_i32_0 : i32, i32
  }
  func.func @transform_6(%arg0: i32) -> (i32, i32) {
    %c0_i32 = arith.constant 0 : i32
    %c0_i32_0 = arith.constant 0 : i32
    %c0_i32_1 = arith.constant 0 : i32
    return %c0_i32, %c0_i32_0 : i32, i32
  }
  func.func @transform_7(%arg0: i32) -> (i32, i32, i32) {
    %c0_i32 = arith.constant 0 : i32
    %c0_i32_0 = arith.constant 0 : i32
    %c0_i32_1 = arith.constant 0 : i32
    return %arg0, %c0_i32, %c0_i32_0 : i32, i32, i32
  }
}

</mosaic_0001>

<llo_original>
// kernel: custom_net_forward.1
$region0: #{custom_net_forward.1}
  #allocation0 [shape = 'u32[]', space=smem, size = 0x4, offset = 0x4, fixed_abs, tag = 'smem constant byte address 0x4 - core index']
  #allocation1 [shape = 'u32[72,128]{1,0:T(1,128)}', space=vmem, size = 0x9000, scoped, tag = 'internal scratch']
  #allocation2 [shape = 'bf16[1,10,10,64]{3,2,1,0:T(8,128)(2,1)}', space=vmem, size = 0xa000, scoped, tag = 'scratch operand']
  %s0 = inlined_call_operand.vmem [shape: bf16[512,27], index: 0, kind: input, shape index: {}]
  %s1 = inlined_call_operand.vmem [shape: bf16[27,64], index: 1, kind: input, shape index: {}]
  %s2 = inlined_call_operand.vmem [shape: f32[1,64], index: 2, kind: input, shape index: {}]
  %s3 = inlined_call_operand.vmem [shape: bf16[576,128], index: 3, kind: input, shape index: {}]
  %s4 = inlined_call_operand.vmem [shape: f32[1,128], index: 4, kind: input, shape index: {}]
  %s5 = inlined_call_operand.vmem [shape: bf16[128,256], index: 5, kind: input, shape index: {}]
  %s6 = inlined_call_operand.vmem [shape: f32[1,256], index: 6, kind: input, shape index: {}]
  %s7 = inlined_call_operand.vmem [shape: f32[2,1,256], index: 7, kind: output, shape index: {}]
  %s8 = sld [smem:[#allocation0]]
  $region61: #{custom_net_forward.1} parent=0
    _
  %s10 = ssub.s32 1, %s8
  %s11 = scalar_select 0, %s10, %s8
  loop: start=0, step=1, limit=4
  $region2: #{custom_net_forward.1} parent=0 // loop_pre_header
    _
  $region3: #{custom_net_forward.1} parent=0 // loop_header
    %s13 = sphi 0, %s17
    %p14 = scmp.ge.s32.totalorder %s13, 4
    %s23 = sphi 0, %s25
    %s26 = sphi 0, %s23
    %s27 = sphi 0, %s26
    %s43 = sphi 0, %s27
    %s47 = sphi 0, %s47
    %s49 = sphi 0, %s47
    %s50 = sphi 0, %s49
    %s64 = sphi 0, %s50
    %s68 = sphi 0, %s68
    %s70 = sphi 0, %s68
    %s71 = sphi 0, %s70
    %s85 = sphi 0, %s71
    %s89 = sphi 0, %s89
    %s91 = sphi 0, %s89
    %s92 = sphi 0, %s91
    %s106 = sphi 0, %s92
    %s110 = sphi 0, %s110
    %s112 = sphi 0, %s110
    %s113 = sphi 0, %s112
    %s127 = sphi 0, %s113
    %s131 = sphi 0, %s131
    %s133 = sphi 0, %s131
    %s134 = sphi 0, %s133
    %s148 = sphi 0, %s134
    %s152 = sphi 0, %s152
    %s154 = sphi 0, %s152
    %s155 = sphi 0, %s154
    %s169 = sphi 0, %s155
    %s175 = sphi 0, %s177
    %s178 = sphi 0, %s175
    %s179 = sphi 0, %s178
    %s195 = sphi 0, %s179
  $region4: #{custom_net_forward.1} parent=0 // loop_header_branch
    %16 = sbr.rel (%p14) target = $region8
  $region5: #{custom_net_forward.1} parent=0 // loop_body
    %s18 = ssub.s32 %s13, 1
    %s19 = ssub.s32 %s13, 2
    %s20 = sadd.s32 %s13, 1
    %s21 = ssub.s32 %s13, %s20
    %p22 = scmp.eq.s32.totalorder %s21, 0
    %s24 = sadd.s32 %s23, 1
    %s25 = scalar_select %p22, %s23, %s24
    %p28 = pneg %p22
    %p29 = scmp.eq.s32.totalorder %s13, 1
    %p30 = por %p28, %p29
    %p31 = scmp.ne.s32.totalorder %s23, %s26
    %p32 = scmp.eq.s32.totalorder %s13, 0
    %p33 = por %p31, %p32
    %p34 = scmp.ne.s32.totalorder %s23, %s26
    %p35 = scmp.eq.s32.totalorder %s18, 1
    %p36 = por %p34, %p35
    %p37 = scmp.ne.s32.totalorder %s26, %s27
    %p38 = scmp.eq.s32.totalorder %s18, 0
    %p39 = por %p37, %p38
    %p40 = scmp.ne.s32.totalorder %s26, %s27
    %p41 = scmp.eq.s32.totalorder %s19, 1
    %p42 = por %p40, %p41
    %p44 = scmp.ne.s32.totalorder %s27, %s43
    %p45 = scmp.eq.s32.totalorder %s19, 0
    %p46 = por %p44, %p45
    %s48 = sadd.s32 %s47, 1
    %p51 = scmp.eq.s32.totalorder %s13, 1
    %p52 = scmp.ne.s32.totalorder %s47, %s49
    %p53 = scmp.eq.s32.totalorder %s13, 0
    %p54 = por %p52, %p53
    %p55 = scmp.ne.s32.totalorder %s47, %s49
    %p56 = scmp.eq.s32.totalorder %s18, 1
    %p57 = por %p55, %p56
    %p58 = scmp.ne.s32.totalorder %s49, %s50
    %p59 = scmp.eq.s32.totalorder %s18, 0
    %p60 = por %p58, %p59
    %p61 = scmp.ne.s32.totalorder %s49, %s50
    %p62 = scmp.eq.s32.totalorder %s19, 1
    %p63 = por %p61, %p62
    %p65 = scmp.ne.s32.totalorder %s50, %s64
    %p66 = scmp.eq.s32.totalorder %s19, 0
    %p67 = por %p65, %p66
    %s69 = sadd.s32 %s68, 1
    %p72 = scmp.eq.s32.totalorder %s13, 1
    %p73 = scmp.ne.s32.totalorder %s68, %s70
    %p74 = scmp.eq.s32.totalorder %s13, 0
    %p75 = por %p73, %p74
    %p76 = scmp.ne.s32.totalorder %s68, %s70
    %p77 = scmp.eq.s32.totalorder %s18, 1
    %p78 = por %p76, %p77
    %p79 = scmp.ne.s32.totalorder %s70, %s71
    %p80 = scmp.eq.s32.totalorder %s18, 0
    %p81 = por %p79, %p80
    %p82 = scmp.ne.s32.totalorder %s70, %s71
    %p83 = scmp.eq.s32.totalorder %s19, 1
    %p84 = por %p82, %p83
    %p86 = scmp.ne.s32.totalorder %s71, %s85
    %p87 = scmp.eq.s32.totalorder %s19, 0
    %p88 = por %p86, %p87
    %s90 = sadd.s32 %s89, 1
    %p93 = scmp.eq.s32.totalorder %s13, 1
    %p94 = scmp.ne.s32.totalorder %s89, %s91
    %p95 = scmp.eq.s32.totalorder %s13, 0
    %p96 = por %p94, %p95
    %p97 = scmp.ne.s32.totalorder %s89, %s91
    %p98 = scmp.eq.s32.totalorder %s18, 1
    %p99 = por %p97, %p98
    %p100 = scmp.ne.s32.totalorder %s91, %s92
    %p101 = scmp.eq.s32.totalorder %s18, 0
    %p102 = por %p100, %p101
    %p103 = scmp.ne.s32.totalorder %s91, %s92
    %p104 = scmp.eq.s32.totalorder %s19, 1
    %p105 = por %p103, %p104
    %p107 = scmp.ne.s32.totalorder %s92, %s106
    %p108 = scmp.eq.s32.totalorder %s19, 0
    %p109 = por %p107, %p108
    %s111 = sadd.s32 %s110, 1
    %p114 = scmp.eq.s32.totalorder %s13, 1
    %p115 = scmp.ne.s32.totalorder %s110, %s112
    %p116 = scmp.eq.s32.totalorder %s13, 0
    %p117 = por %p115, %p116
    %p118 = scmp.ne.s32.totalorder %s110, %s112
    %p119 = scmp.eq.s32.totalorder %s18, 1
    %p120 = por %p118, %p119
    %p121 = scmp.ne.s32.totalorder %s112, %s113
    %p122 = scmp.eq.s32.totalorder %s18, 0
    %p123 = por %p121, %p122
    %p124 = scmp.ne.s32.totalorder %s112, %s113
    %p125 = scmp.eq.s32.totalorder %s19, 1
    %p126 = por %p124, %p125
    %p128 = scmp.ne.s32.totalorder %s113, %s127
    %p129 = scmp.eq.s32.totalorder %s19, 0
    %p130 = por %p128, %p129
    %s132 = sadd.s32 %s131, 1
    %p135 = scmp.eq.s32.totalorder %s13, 1
    %p136 = scmp.ne.s32.totalorder %s131, %s133
    %p137 = scmp.eq.s32.totalorder %s13, 0
    %p138 = por %p136, %p137
    %p139 = scmp.ne.s32.totalorder %s131, %s133
    %p140 = scmp.eq.s32.totalorder %s18, 1
    %p141 = por %p139, %p140
    %p142 = scmp.ne.s32.totalorder %s133, %s134
    %p143 = scmp.eq.s32.totalorder %s18, 0
    %p144 = por %p142, %p143
    %p145 = scmp.ne.s32.totalorder %s133, %s134
    %p146 = scmp.eq.s32.totalorder %s19, 1
    %p147 = por %p145, %p146
    %p149 = scmp.ne.s32.totalorder %s134, %s148
    %p150 = scmp.eq.s32.totalorder %s19, 0
    %p151 = por %p149, %p150
    %s153 = sadd.s32 %s152, 1
    %p156 = scmp.eq.s32.totalorder %s13, 1
    %p157 = scmp.ne.s32.totalorder %s152, %s154
    %p158 = scmp.eq.s32.totalorder %s13, 0
    %p159 = por %p157, %p158
    %p160 = scmp.ne.s32.totalorder %s152, %s154
    %p161 = scmp.eq.s32.totalorder %s18, 1
    %p162 = por %p160, %p161
    %p163 = scmp.ne.s32.totalorder %s154, %s155
    %p164 = scmp.eq.s32.totalorder %s18, 0
    %p165 = por %p163, %p164
    %p166 = scmp.ne.s32.totalorder %s154, %s155
    %p167 = scmp.eq.s32.totalorder %s19, 1
    %p168 = por %p166, %p167
    %p170 = scmp.ne.s32.totalorder %s155, %s169
    %p171 = scmp.eq.s32.totalorder %s19, 0
    %p172 = por %p170, %p171
    %s173 = ssub.s32 %s13, %s20
    %p174 = scmp.eq.s32.totalorder %s173, 0
    %s176 = sadd.s32 %s175, 1
    %s177 = scalar_select %p174, %s175, %s176
    %p180 = pneg %p174
    %p181 = scmp.eq.s32.totalorder %s13, 1
    %p182 = por %p180, %p181
    %p183 = scmp.ne.s32.totalorder %s175, %s178
    %p184 = scmp.eq.s32.totalorder %s13, 0
    %p185 = por %p183, %p184
    %p186 = scmp.ne.s32.totalorder %s175, %s178
    %p187 = scmp.eq.s32.totalorder %s18, 1
    %p188 = por %p186, %p187
    %p189 = scmp.ne.s32.totalorder %s178, %s179
    %p190 = scmp.eq.s32.totalorder %s18, 0
    %p191 = por %p189, %p190
    %p192 = scmp.ne.s32.totalorder %s178, %s179
    %p193 = scmp.eq.s32.totalorder %s19, 1
    %p194 = por %p192, %p193
    %p196 = scmp.ne.s32.totalorder %s179, %s195
    %p197 = scmp.eq.s32.totalorder %s19, 0
    %p198 = por %p196, %p197
    %p199 = scmp.le.s32.totalorder 1, %s13
    %p200 = scmp.lt.s32.totalorder %s13, 3
    %p201 = pnand %p199, %p200
    %p202 = pneg %p201
    // Predicated region
    $region9: #{custom_net_forward.1} parent=5 // pred_check
      _
    $region10: #{custom_net_forward.1} parent=5 // pred_check_branch
      %204 = sbr.rel (%p201) target = $region12
    $region11: #{custom_net_forward.1} parent=5 // pred_region
      %s205 = ssub.s32 %s13, 1
      // Predicated region
      $region13: #{custom_net_forward.1} parent=11 // pred_check
        %p206 = pneg %p60
      $region14: #{custom_net_forward.1} parent=11 // pred_check_branch
        %208 = sbr.rel (%p206) target = $region16
      $region15: #{custom_net_forward.1} parent=11 // pred_region
        _
      $region16: #{custom_net_forward.1} parent=11 // pred_fallthru
        _
      // Predicated region
      $region17: #{custom_net_forward.1} parent=11 // pred_check
        %p209 = pneg %p81
      $region18: #{custom_net_forward.1} parent=11 // pred_check_branch
        %211 = sbr.rel (%p209) target = $region20
      $region19: #{custom_net_forward.1} parent=11 // pred_region
        _
      $region20: #{custom_net_forward.1} parent=11 // pred_fallthru
        _
      // Predicated region
      $region21: #{custom_net_forward.1} parent=11 // pred_check
        %p212 = pneg %p102
      $region22: #{custom_net_forward.1} parent=11 // pred_check_branch
        %214 = sbr.rel (%p212) target = $region24
      $region23: #{custom_net_forward.1} parent=11 // pred_region
        _
      $region24: #{custom_net_forward.1} parent=11 // pred_fallthru
        _
      // Predicated region
      $region25: #{custom_net_forward.1} parent=11 // pred_check
        %p215 = pneg %p123
      $region26: #{custom_net_forward.1} parent=11 // pred_check_branch
        %217 = sbr.rel (%p215) target = $region28
      $region27: #{custom_net_forward.1} parent=11 // pred_region
        _
      $region28: #{custom_net_forward.1} parent=11 // pred_fallthru
        _
      // Predicated region
      $region29: #{custom_net_forward.1} parent=11 // pred_check
        %p218 = pneg %p144
      $region30: #{custom_net_forward.1} parent=11 // pred_check_branch
        %220 = sbr.rel (%p218) target = $region32
      $region31: #{custom_net_forward.1} parent=11 // pred_region
        _
      $region32: #{custom_net_forward.1} parent=11 // pred_fallthru
        _
      // Predicated region
      $region33: #{custom_net_forward.1} parent=11 // pred_check
        %p221 = pneg %p165
      $region34: #{custom_net_forward.1} parent=11 // pred_check_branch
        %223 = sbr.rel (%p221) target = $region36
      $region35: #{custom_net_forward.1} parent=11 // pred_region
        _
      $region36: #{custom_net_forward.1} parent=11 // pred_fallthru
        _
    $region12: #{custom_net_forward.1} parent=5 // pred_fallthru
      _
    %p224 = scmp.lt.s32.totalorder %s13, 2
    // Predicated region
    $region37: #{custom_net_forward.1} parent=5 // pred_check
      %p225 = pneg %p224
    $region38: #{custom_net_forward.1} parent=5 // pred_check_branch
      %227 = sbr.rel (%p225) target = $region40
    $region39: #{custom_net_forward.1} parent=5 // pred_region
      // Predicated region
      $region41: #{custom_net_forward.1} parent=39 // pred_check
        %p228 = pneg %p33
      $region42: #{custom_net_forward.1} parent=39 // pred_check_branch
        %230 = sbr.rel (%p228) target = $region44
      $region43: #{custom_net_forward.1} parent=39 // pred_region
        %s231 = smul.u32 32, %s13
        %p232 = scmp.lt.s32.totalorder %s231, 63
        %s233 = scalar_select %p232, %s231, 63
        %s234 = smul.addr %s233, 4
        %s235 = scalar_lea.vmem %s0, %s234
        %s236 = smul.u32 32, %s13
      $region44: #{custom_net_forward.1} parent=39 // pred_fallthru
        _
    $region40: #{custom_net_forward.1} parent=5 // pred_fallthru
      _
    %p237 = scmp.le.s32.totalorder 1, %s13
    %p238 = scmp.lt.s32.totalorder %s13, 3
    %p239 = pnand %p237, %p238
    %p240 = pneg %p239
    // Predicated region
    $region45: #{custom_net_forward.1} parent=5 // pred_check
      _
    $region46: #{custom_net_forward.1} parent=5 // pred_check_branch
      %242 = sbr.rel (%p239) target = $region48
    $region47: #{custom_net_forward.1} parent=5 // pred_region
      %s243 = ssub.s32 %s13, 1
      %s244 = smul.u32 32, %s18
      %p245 = scmp.lt.s32.totalorder %s244, 63
      %s246 = scalar_select %p245, %s244, 63
      %s247 = smul.addr %s246, 4
      %s248 = scalar_lea.vmem %s0, %s247
      %p249 = pneg %p39
      %p250 = pneg %p36
      %p251 = pneg %p60
      %p252 = pneg %p57
      %p253 = pneg %p81
      %p254 = pneg %p78
      %p255 = pneg %p102
      %p256 = pneg %p99
      %p257 = pneg %p123
      %p258 = pneg %p120
      %p259 = pneg %p144
      %p260 = pneg %p141
      %p261 = pneg %p165
      %p262 = pneg %p162
      %p263 = pneg %p191
      %p264 = pneg %p188
      %p265 = scmp.lt.s32.totalorder %s18, 1
      %s266 = scalar_select %p265, %s18, 1
      %s267 = smul.addr %s266, 2
      %s268 = scalar_lea.vmem %s7, %s267
      %s269 = smul.u32 32, %s18
      %p270 = scmp.lt.s32.totalorder %s269, 63
      %s271 = scalar_select %p270, %s269, 63
      %s272 = smul.addr %s271, 4
      %s273 = scalar_lea.vmem %s0, %s272
      %s274 = smul.u32 32, %s18
      %p275 = scmp.lt.s32.totalorder %s18, 1
      %s276 = scalar_select %p275, %s18, 1
      %s277 = smul.addr %s276, 2
      %s278 = scalar_lea.vmem %s7, %s277
      %v280 = vld [vmem:[%s273] sm:$0xf]
      %v281 = vld [vmem:[%s273 + $0x4] sm:$0xf]
      %v282 = vld [vmem:[%s273 + $0x8] sm:$0xf]
      %v283 = vld [vmem:[%s273 + $0xc] sm:$0xf]
      %v284 = vld [vmem:[%s273 + $0x10] sm:$0xf]
      %v285 = vld [vmem:[%s273 + $0x14] sm:$0xf]
      %v286 = vld [vmem:[%s273 + $0x18] sm:$0xf]
      %v287 = vld [vmem:[%s273 + $0x1c] sm:$0xf]
      %v288 = vld [vmem:[%s273 + $0x20] sm:$0xf]
      %v289 = vld [vmem:[%s273 + $0x24] sm:$0xf]
      %v290 = vld [vmem:[%s273 + $0x28] sm:$0xf]
      %v291 = vld [vmem:[%s273 + $0x2c] sm:$0xf]
      %v292 = vld [vmem:[%s273 + $0x30] sm:$0xf]
      %v293 = vld [vmem:[%s273 + $0x34] sm:$0xf]
      %v294 = vld [vmem:[%s273 + $0x38] sm:$0xf]
      %v295 = vld [vmem:[%s273 + $0x3c] sm:$0xf]
      %v296 = vld [vmem:[%s273 + $0x40] sm:$0xf]
      %v297 = vld [vmem:[%s273 + $0x44] sm:$0xf]
      %v298 = vld [vmem:[%s273 + $0x48] sm:$0xf]
      %v299 = vld [vmem:[%s273 + $0x4c] sm:$0xf]
      %v300 = vld [vmem:[%s273 + $0x50] sm:$0xf]
      %v301 = vld [vmem:[%s273 + $0x54] sm:$0xf]
      %v302 = vld [vmem:[%s273 + $0x58] sm:$0xf]
      %v303 = vld [vmem:[%s273 + $0x5c] sm:$0xf]
      %v304 = vld [vmem:[%s273 + $0x60] sm:$0xf]
      %v305 = vld [vmem:[%s273 + $0x64] sm:$0xf]
      %v306 = vld [vmem:[%s273 + $0x68] sm:$0xf]
      %v307 = vld [vmem:[%s273 + $0x6c] sm:$0xf]
      %v308 = vld [vmem:[%s273 + $0x70] sm:$0xf]
      %v309 = vld [vmem:[%s273 + $0x74] sm:$0xf]
      %v310 = vld [vmem:[%s273 + $0x78] sm:$0xf]
      %v311 = vld [vmem:[%s273 + $0x7c] sm:$0xf]
      %v312 = vld [vmem:[%s1] sm:$0xf]
      %v313 = vld [vmem:[%s1 + $0x4] sm:$0xf]
      %v314 = vld [vmem:[%s1 + $0x8] sm:$0xf]
      %v315 = vld [vmem:[%s1 + $0xc] sm:$0x3]
      %v316 = vld [vmem:[%s2] sm:$0x1]
      %v318 = vperm.slane %v316, 0
      %v352 = vunpack.c.l.b16 %v280
      %v353 = vunpack.c.l.b16 %v281
      %v354 = vunpack.c.l.b16 %v282
      %v355 = vunpack.c.l.b16 %v283
      %v356 = vunpack.c.l.b16 %v284
      %v357 = vunpack.c.l.b16 %v285
      %v358 = vunpack.c.l.b16 %v286
      %v359 = vunpack.c.l.b16 %v287
      %v360 = vunpack.c.l.b16 %v288
      %v361 = vunpack.c.l.b16 %v289
      %v362 = vunpack.c.l.b16 %v290
      %v363 = vunpack.c.l.b16 %v291
      %v364 = vunpack.c.l.b16 %v292
      %v365 = vunpack.c.l.b16 %v293
      %v366 = vunpack.c.l.b16 %v294
      %v367 = vunpack.c.l.b16 %v295
      %v368 = vunpack.c.l.b16 %v296
      %v369 = vunpack.c.l.b16 %v297
      %v370 = vunpack.c.l.b16 %v298
      %v371 = vunpack.c.l.b16 %v299
      %v372 = vunpack.c.l.b16 %v300
      %v373 = vunpack.c.l.b16 %v301
      %v374 = vunpack.c.l.b16 %v302
      %v375 = vunpack.c.l.b16 %v303
      %v376 = vunpack.c.l.b16 %v304
      %v377 = vunpack.c.l.b16 %v305
      %v378 = vunpack.c.l.b16 %v306
      %v379 = vunpack.c.l.b16 %v307
      %v380 = vunpack.c.l.b16 %v308
      %v381 = vunpack.c.l.b16 %v309
      %v382 = vunpack.c.l.b16 %v310
      %v383 = vunpack.c.l.b16 %v311
      %v384 = vpack.c.b16 %v353, %v352
      %v385 = vpack.c.b16 %v355, %v354
      %v386 = vpack.c.b16 %v357, %v356
      %v387 = vpack.c.b16 %v359, %v358
      %v388 = vpack.c.b16 %v361, %v360
      %v389 = vpack.c.b16 %v363, %v362
      %v390 = vpack.c.b16 %v365, %v364
      %v391 = vpack.c.b16 %v367, %v366
      %v392 = vpack.c.b16 %v369, %v368
      %v393 = vpack.c.b16 %v371, %v370
      %v394 = vpack.c.b16 %v373, %v372
      %v395 = vpack.c.b16 %v375, %v374
      %v396 = vpack.c.b16 %v377, %v376
      %v397 = vpack.c.b16 %v379, %v378
      %v398 = vpack.c.b16 %v381, %v380
      %v399 = vpack.c.b16 %v383, %v382
      %v404 = vunpack.c.l.b16 %v312
      %v405 = vunpack.c.l.b16 %v313
      %v406 = vunpack.c.l.b16 %v314
      %v407 = vunpack.c.l.b16 %v315
      %v408 = vpack.c.b16 %v405, %v404
      %v409 = vpack.c.b16 %v407, %v406
      %vm411 = vcmask 220160
      %v413 = vsel %vm411, %v384, 0
      %v416 = vsel %vm411, %v385, 0
      %v419 = vsel %vm411, %v386, 0
      %v422 = vsel %vm411, %v387, 0
      %v425 = vsel %vm411, %v388, 0
      %v428 = vsel %vm411, %v389, 0
      %v431 = vsel %vm411, %v390, 0
      %v434 = vsel %vm411, %v391, 0
      %v437 = vsel %vm411, %v392, 0
      %v440 = vsel %vm411, %v393, 0
      %v443 = vsel %vm411, %v394, 0
      %v446 = vsel %vm411, %v395, 0
      %v449 = vsel %vm411, %v396, 0
      %v452 = vsel %vm411, %v397, 0
      %v455 = vsel %vm411, %v398, 0
      %v458 = vsel %vm411, %v399, 0
      %vm460 = vcmask 1044480
      %vm461 = vcmask 1045504
      %v462 = vsel %vm460, 4294967295, 65535
      %v463 = vsel %vm461, %v462, 0
      %v465 = vand.u32 %v409, %v463
      %467 = vmatpush.bf16.msra.mxu0 0
      %468 = vmatpush.bf16.msra.mxu0 0
      %469 = vmatpush.bf16.msra.mxu0 0
      %470 = vmatpush.bf16.msra.mxu0 0
      %471 = vmatpush.bf16.msra.mxu0 0
      %472 = vmatpush.bf16.msra.mxu0 0
      %473 = vmatpush.bf16.msra.mxu0 %v465
      %474 = vmatpush.bf16.msra.mxu0 %v408
      %475 = vmatmul.bf16.gmra.mxu0 %v413
      %v476 = vpop.f32.mrf.mxu0
      %v477 = vadd.f32 %v318, %v476
      %v478 = vpop.f32.mrf.mxu0
      %v479 = vadd.f32 %v318, %v478
      %480 = vmatmul.bf16.gmra.mxu0 %v416
      %v481 = vpop.f32.mrf.mxu0
      %v482 = vadd.f32 %v318, %v481
      %v483 = vpop.f32.mrf.mxu0
      %v484 = vadd.f32 %v318, %v483
      %485 = vmatmul.bf16.gmra.mxu0 %v419
      %v486 = vpop.f32.mrf.mxu0
      %v487 = vadd.f32 %v318, %v486
      %v488 = vpop.f32.mrf.mxu0
      %v489 = vadd.f32 %v318, %v488
      %490 = vmatmul.bf16.gmra.mxu0 %v422
      %v491 = vpop.f32.mrf.mxu0
      %v492 = vadd.f32 %v318, %v491
      %v493 = vpop.f32.mrf.mxu0
      %v494 = vadd.f32 %v318, %v493
      %495 = vmatmul.bf16.gmra.mxu0 %v425
      %v496 = vpop.f32.mrf.mxu0
      %v497 = vadd.f32 %v318, %v496
      %v498 = vpop.f32.mrf.mxu0
      %v499 = vadd.f32 %v318, %v498
      %500 = vmatmul.bf16.gmra.mxu0 %v428
      %v501 = vpop.f32.mrf.mxu0
      %v502 = vadd.f32 %v318, %v501
      %v503 = vpop.f32.mrf.mxu0
      %v504 = vadd.f32 %v318, %v503
      %505 = vmatmul.bf16.gmra.mxu0 %v431
      %v506 = vpop.f32.mrf.mxu0
      %v507 = vadd.f32 %v318, %v506
      %v508 = vpop.f32.mrf.mxu0
      %v509 = vadd.f32 %v318, %v508
      %510 = vmatmul.bf16.gmra.mxu0 %v434
      %v511 = vpop.f32.mrf.mxu0
      %v512 = vadd.f32 %v318, %v511
      %v513 = vpop.f32.mrf.mxu0
      %v514 = vadd.f32 %v318, %v513
      %515 = vmatmul.bf16.gmra.mxu0 %v437
      %v516 = vpop.f32.mrf.mxu0
      %v517 = vadd.f32 %v318, %v516
      %v518 = vpop.f32.mrf.mxu0
      %v519 = vadd.f32 %v318, %v518
      %520 = vmatmul.bf16.gmra.mxu0 %v440
      %v521 = vpop.f32.mrf.mxu0
      %v522 = vadd.f32 %v318, %v521
      %v523 = vpop.f32.mrf.mxu0
      %v524 = vadd.f32 %v318, %v523
      %525 = vmatmul.bf16.gmra.mxu0 %v443
      %v526 = vpop.f32.mrf.mxu0
      %v527 = vadd.f32 %v318, %v526
      %v528 = vpop.f32.mrf.mxu0
      %v529 = vadd.f32 %v318, %v528
      %530 = vmatmul.bf16.gmra.mxu0 %v446
      %v531 = vpop.f32.mrf.mxu0
      %v532 = vadd.f32 %v318, %v531
      %v533 = vpop.f32.mrf.mxu0
      %v534 = vadd.f32 %v318, %v533
      %535 = vmatmul.bf16.gmra.mxu0 %v449
      %v536 = vpop.f32.mrf.mxu0
      %v537 = vadd.f32 %v318, %v536
      %v538 = vpop.f32.mrf.mxu0
      %v539 = vadd.f32 %v318, %v538
      %540 = vmatmul.bf16.gmra.mxu0 %v452
      %v541 = vpop.f32.mrf.mxu0
      %v542 = vadd.f32 %v318, %v541
      %v543 = vpop.f32.mrf.mxu0
      %v544 = vadd.f32 %v318, %v543
      %545 = vmatmul.bf16.gmra.mxu0 %v455
      %v546 = vpop.f32.mrf.mxu0
      %v547 = vadd.f32 %v318, %v546
      %v548 = vpop.f32.mrf.mxu0
      %v549 = vadd.f32 %v318, %v548
      %550 = vmatmul.bf16.gmra.mxu0 %v458
      %v551 = vpop.f32.mrf.mxu0
      %v552 = vadd.f32 %v318, %v551
      %v553 = vpop.f32.mrf.mxu0
      %v554 = vadd.f32 %v318, %v553
      %555 = vdwg.mxu0
      %v556 = vmax.f32 %v477, 0.0
      %v557 = vmax.f32 %v479, 0.0
      %v558 = vmax.f32 %v482, 0.0
      %v559 = vmax.f32 %v484, 0.0
      %v560 = vmax.f32 %v487, 0.0
      %v561 = vmax.f32 %v489, 0.0
      %v562 = vmax.f32 %v492, 0.0
      %v563 = vmax.f32 %v494, 0.0
      %v564 = vmax.f32 %v497, 0.0
      %v565 = vmax.f32 %v499, 0.0
      %v566 = vmax.f32 %v502, 0.0
      %v567 = vmax.f32 %v504, 0.0
      %v568 = vmax.f32 %v507, 0.0
      %v569 = vmax.f32 %v509, 0.0
      %v570 = vmax.f32 %v512, 0.0
      %v571 = vmax.f32 %v514, 0.0
      %v572 = vmax.f32 %v517, 0.0
      %v573 = vmax.f32 %v519, 0.0
      %v574 = vmax.f32 %v522, 0.0
      %v575 = vmax.f32 %v524, 0.0
      %v576 = vmax.f32 %v527, 0.0
      %v577 = vmax.f32 %v529, 0.0
      %v578 = vmax.f32 %v532, 0.0
      %v579 = vmax.f32 %v534, 0.0
      %v580 = vmax.f32 %v537, 0.0
      %v581 = vmax.f32 %v539, 0.0
      %v582 = vmax.f32 %v542, 0.0
      %v583 = vmax.f32 %v544, 0.0
      %v584 = vmax.f32 %v547, 0.0
      %v585 = vmax.f32 %v549, 0.0
      %v586 = vmax.f32 %v552, 0.0
      %v587 = vmax.f32 %v554, 0.0
      %v620 = vrot.slane %v556, 2
      %v621 = vrot.slane %v556, 4
      %v622 = vrot.slane %v556, 6
      %v623 = vrot.slane %v557, 2
      %v624 = vrot.slane %v557, 4
      %v625 = vrot.slane %v557, 6
      %v626 = vrot.slane %v558, 2
      %v627 = vrot.slane %v558, 4
      %v628 = vrot.slane %v558, 6
      %v629 = vrot.slane %v559, 2
      %v630 = vrot.slane %v559, 4
      %v631 = vrot.slane %v559, 6
      %v632 = vrot.slane %v560, 2
      %v633 = vrot.slane %v560, 4
      %v634 = vrot.slane %v560, 6
      %v635 = vrot.slane %v561, 2
      %v636 = vrot.slane %v561, 4
      %v637 = vrot.slane %v561, 6
      %v638 = vrot.slane %v562, 2
      %v639 = vrot.slane %v562, 4
      %v640 = vrot.slane %v562, 6
      %v641 = vrot.slane %v563, 2
      %v642 = vrot.slane %v563, 4
      %v643 = vrot.slane %v563, 6
      %v644 = vrot.slane %v564, 2
      %v645 = vrot.slane %v564, 4
      %v646 = vrot.slane %v564, 6
      %v647 = vrot.slane %v565, 2
      %v648 = vrot.slane %v565, 4
      %v649 = vrot.slane %v565, 6
      %v650 = vrot.slane %v566, 2
      %v651 = vrot.slane %v566, 4
      %v652 = vrot.slane %v566, 6
      %v653 = vrot.slane %v567, 2
      %v654 = vrot.slane %v567, 4
      %v655 = vrot.slane %v567, 6
      %v656 = vrot.slane %v568, 2
      %v657 = vrot.slane %v568, 4
      %v658 = vrot.slane %v568, 6
      %v659 = vrot.slane %v569, 2
      %v660 = vrot.slane %v569, 4
      %v661 = vrot.slane %v569, 6
      %v662 = vrot.slane %v570, 2
      %v663 = vrot.slane %v570, 4
      %v664 = vrot.slane %v570, 6
      %v665 = vrot.slane %v571, 2
      %v666 = vrot.slane %v571, 4
      %v667 = vrot.slane %v571, 6
      %v668 = vrot.slane %v572, 2
      %v669 = vrot.slane %v572, 4
      %v670 = vrot.slane %v572, 6
      %v671 = vrot.slane %v573, 2
      %v672 = vrot.slane %v573, 4
      %v673 = vrot.slane %v573, 6
      %v674 = vrot.slane %v574, 2
      %v675 = vrot.slane %v574, 4
      %v676 = vrot.slane %v574, 6
      %v677 = vrot.slane %v575, 2
      %v678 = vrot.slane %v575, 4
      %v679 = vrot.slane %v575, 6
      %v680 = vrot.slane %v576, 2
      %v681 = vrot.slane %v576, 4
      %v682 = vrot.slane %v576, 6
      %v683 = vrot.slane %v577, 2
      %v684 = vrot.slane %v577, 4
      %v685 = vrot.slane %v577, 6
      %v686 = vrot.slane %v578, 2
      %v687 = vrot.slane %v578, 4
      %v688 = vrot.slane %v578, 6
      %v689 = vrot.slane %v579, 2
      %v690 = vrot.slane %v579, 4
      %v691 = vrot.slane %v579, 6
      %v692 = vrot.slane %v580, 2
      %v693 = vrot.slane %v580, 4
      %v694 = vrot.slane %v580, 6
      %v695 = vrot.slane %v581, 2
      %v696 = vrot.slane %v581, 4
      %v697 = vrot.slane %v581, 6
      %v698 = vrot.slane %v582, 2
      %v699 = vrot.slane %v582, 4
      %v700 = vrot.slane %v582, 6
      %v701 = vrot.slane %v583, 2
      %v702 = vrot.slane %v583, 4
      %v703 = vrot.slane %v583, 6
      %v704 = vrot.slane %v584, 2
      %v705 = vrot.slane %v584, 4
      %v706 = vrot.slane %v584, 6
      %v707 = vrot.slane %v585, 2
      %v708 = vrot.slane %v585, 4
      %v709 = vrot.slane %v585, 6
      %v710 = vrot.slane %v586, 2
      %v711 = vrot.slane %v586, 4
      %v712 = vrot.slane %v586, 6
      %v713 = vrot.slane %v587, 2
      %v714 = vrot.slane %v587, 4
      %v715 = vrot.slane %v587, 6
      %v812 = vrot.slane %v556, 7
      %v813 = vrot.slane %v812, 2
      %v814 = vrot.slane %v620, 7
      %v815 = vrot.slane %v814, 2
      %v816 = vrot.slane %v621, 7
      %v817 = vrot.slane %v816, 2
      %v818 = vrot.slane %v622, 7
      %v819 = vrot.slane %v818, 2
      %v820 = vrot.slane %v557, 7
      %v821 = vrot.slane %v820, 2
      %v822 = vrot.slane %v623, 7
      %v823 = vrot.slane %v822, 2
      %v824 = vrot.slane %v624, 7
      %v825 = vrot.slane %v824, 2
      %v826 = vrot.slane %v625, 7
      %v827 = vrot.slane %v826, 2
      %v828 = vrot.slane %v558, 7
      %v829 = vrot.slane %v828, 2
      %v830 = vrot.slane %v626, 7
      %v831 = vrot.slane %v830, 2
      %v832 = vrot.slane %v627, 7
      %v833 = vrot.slane %v832, 2
      %v834 = vrot.slane %v628, 7
      %v835 = vrot.slane %v834, 2
      %v836 = vrot.slane %v559, 7
      %v837 = vrot.slane %v836, 2
      %v838 = vrot.slane %v629, 7
      %v839 = vrot.slane %v838, 2
      %v840 = vrot.slane %v630, 7
      %v841 = vrot.slane %v840, 2
      %v842 = vrot.slane %v631, 7
      %v843 = vrot.slane %v842, 2
      %v844 = vrot.slane %v560, 7
      %v845 = vrot.slane %v844, 2
      %v846 = vrot.slane %v632, 7
      %v847 = vrot.slane %v846, 2
      %v848 = vrot.slane %v633, 7
      %v849 = vrot.slane %v848, 2
      %v850 = vrot.slane %v634, 7
      %v851 = vrot.slane %v850, 2
      %v852 = vrot.slane %v561, 7
      %v853 = vrot.slane %v852, 2
      %v854 = vrot.slane %v635, 7
      %v855 = vrot.slane %v854, 2
      %v856 = vrot.slane %v636, 7
      %v857 = vrot.slane %v856, 2
      %v858 = vrot.slane %v637, 7
      %v859 = vrot.slane %v858, 2
      %v860 = vrot.slane %v562, 7
      %v861 = vrot.slane %v860, 2
      %v862 = vrot.slane %v638, 7
      %v863 = vrot.slane %v862, 2
      %v864 = vrot.slane %v639, 7
      %v865 = vrot.slane %v864, 2
      %v866 = vrot.slane %v640, 7
      %v867 = vrot.slane %v866, 2
      %v868 = vrot.slane %v563, 7
      %v869 = vrot.slane %v868, 2
      %v870 = vrot.slane %v641, 7
      %v871 = vrot.slane %v870, 2
      %v872 = vrot.slane %v642, 7
      %v873 = vrot.slane %v872, 2
      %v874 = vrot.slane %v643, 7
      %v875 = vrot.slane %v874, 2
      %v876 = vrot.slane %v564, 7
      %v877 = vrot.slane %v876, 2
      %v878 = vrot.slane %v644, 7
      %v879 = vrot.slane %v878, 2
      %v880 = vrot.slane %v645, 7
      %v881 = vrot.slane %v880, 2
      %v882 = vrot.slane %v646, 7
      %v883 = vrot.slane %v882, 2
      %v884 = vrot.slane %v565, 7
      %v885 = vrot.slane %v884, 2
      %v886 = vrot.slane %v647, 7
      %v887 = vrot.slane %v886, 2
      %v888 = vrot.slane %v648, 7
      %v889 = vrot.slane %v888, 2
      %v890 = vrot.slane %v649, 7
      %v891 = vrot.slane %v890, 2
      %v892 = vrot.slane %v566, 7
      %v893 = vrot.slane %v892, 2
      %v894 = vrot.slane %v650, 7
      %v895 = vrot.slane %v894, 2
      %v896 = vrot.slane %v651, 7
      %v897 = vrot.slane %v896, 2
      %v898 = vrot.slane %v652, 7
      %v899 = vrot.slane %v898, 2
      %v900 = vrot.slane %v567, 7
      %v901 = vrot.slane %v900, 2
      %v902 = vrot.slane %v653, 7
      %v903 = vrot.slane %v902, 2
      %v904 = vrot.slane %v654, 7
      %v905 = vrot.slane %v904, 2
      %v906 = vrot.slane %v655, 7
      %v907 = vrot.slane %v906, 2
      %v908 = vrot.slane %v568, 7
      %v909 = vrot.slane %v908, 2
      %v910 = vrot.slane %v656, 7
      %v911 = vrot.slane %v910, 2
      %v912 = vrot.slane %v657, 7
      %v913 = vrot.slane %v912, 2
      %v914 = vrot.slane %v658, 7
      %v915 = vrot.slane %v914, 2
      %v916 = vrot.slane %v569, 7
      %v917 = vrot.slane %v916, 2
      %v918 = vrot.slane %v659, 7
      %v919 = vrot.slane %v918, 2
      %v920 = vrot.slane %v660, 7
      %v921 = vrot.slane %v920, 2
      %v922 = vrot.slane %v661, 7
      %v923 = vrot.slane %v922, 2
      %v924 = vrot.slane %v570, 7
      %v925 = vrot.slane %v924, 2
      %v926 = vrot.slane %v662, 7
      %v927 = vrot.slane %v926, 2
      %v928 = vrot.slane %v663, 7
      %v929 = vrot.slane %v928, 2
      %v930 = vrot.slane %v664, 7
      %v931 = vrot.slane %v930, 2
      %v932 = vrot.slane %v571, 7
      %v933 = vrot.slane %v932, 2
      %v934 = vrot.slane %v665, 7
      %v935 = vrot.slane %v934, 2
      %v936 = vrot.slane %v666, 7
      %v937 = vrot.slane %v936, 2
      %v938 = vrot.slane %v667, 7
      %v939 = vrot.slane %v938, 2
      %v940 = vrot.slane %v572, 7
      %v941 = vrot.slane %v940, 2
      %v942 = vrot.slane %v668, 7
      %v943 = vrot.slane %v942, 2
      %v944 = vrot.slane %v669, 7
      %v945 = vrot.slane %v944, 2
      %v946 = vrot.slane %v670, 7
      %v947 = vrot.slane %v946, 2
      %v948 = vrot.slane %v573, 7
      %v949 = vrot.slane %v948, 2
      %v950 = vrot.slane %v671, 7
      %v951 = vrot.slane %v950, 2
      %v952 = vrot.slane %v672, 7
      %v953 = vrot.slane %v952, 2
      %v954 = vrot.slane %v673, 7
      %v955 = vrot.slane %v954, 2
      %v956 = vrot.slane %v574, 7
      %v957 = vrot.slane %v956, 2
      %v958 = vrot.slane %v674, 7
      %v959 = vrot.slane %v958, 2
      %v960 = vrot.slane %v675, 7
      %v961 = vrot.slane %v960, 2
      %v962 = vrot.slane %v676, 7
      %v963 = vrot.slane %v962, 2
      %v964 = vrot.slane %v575, 7
      %v965 = vrot.slane %v964, 2
      %v966 = vrot.slane %v677, 7
      %v967 = vrot.slane %v966, 2
      %v968 = vrot.slane %v678, 7
      %v969 = vrot.slane %v968, 2
      %v970 = vrot.slane %v679, 7
      %v971 = vrot.slane %v970, 2
      %v972 = vrot.slane %v576, 7
      %v973 = vrot.slane %v972, 2
      %v974 = vrot.slane %v680, 7
      %v975 = vrot.slane %v974, 2
      %v976 = vrot.slane %v681, 7
      %v977 = vrot.slane %v976, 2
      %v978 = vrot.slane %v682, 7
      %v979 = vrot.slane %v978, 2
      %v980 = vrot.slane %v577, 7
      %v981 = vrot.slane %v980, 2
      %v982 = vrot.slane %v683, 7
      %v983 = vrot.slane %v982, 2
      %v984 = vrot.slane %v684, 7
      %v985 = vrot.slane %v984, 2
      %v986 = vrot.slane %v685, 7
      %v987 = vrot.slane %v986, 2
      %v988 = vrot.slane %v578, 7
      %v989 = vrot.slane %v988, 2
      %v990 = vrot.slane %v686, 7
      %v991 = vrot.slane %v990, 2
      %v992 = vrot.slane %v687, 7
      %v993 = vrot.slane %v992, 2
      %v994 = vrot.slane %v688, 7
      %v995 = vrot.slane %v994, 2
      %v996 = vrot.slane %v579, 7
      %v997 = vrot.slane %v996, 2
      %v998 = vrot.slane %v689, 7
      %v999 = vrot.slane %v998, 2
      %v1000 = vrot.slane %v690, 7
      %v1001 = vrot.slane %v1000, 2
      %v1002 = vrot.slane %v691, 7
      %v1003 = vrot.slane %v1002, 2
      %v1004 = vrot.slane %v580, 7
      %v1005 = vrot.slane %v1004, 2
      %v1006 = vrot.slane %v692, 7
      %v1007 = vrot.slane %v1006, 2
      %v1008 = vrot.slane %v693, 7
      %v1009 = vrot.slane %v1008, 2
      %v1010 = vrot.slane %v694, 7
      %v1011 = vrot.slane %v1010, 2
      %v1012 = vrot.slane %v581, 7
      %v1013 = vrot.slane %v1012, 2
      %v1014 = vrot.slane %v695, 7
      %v1015 = vrot.slane %v1014, 2
      %v1016 = vrot.slane %v696, 7
      %v1017 = vrot.slane %v1016, 2
      %v1018 = vrot.slane %v697, 7
      %v1019 = vrot.slane %v1018, 2
      %v1020 = vrot.slane %v582, 7
      %v1021 = vrot.slane %v1020, 2
      %v1022 = vrot.slane %v698, 7
      %v1023 = vrot.slane %v1022, 2
      %v1024 = vrot.slane %v699, 7
      %v1025 = vrot.slane %v1024, 2
      %v1026 = vrot.slane %v700, 7
      %v1027 = vrot.slane %v1026, 2
      %v1028 = vrot.slane %v583, 7
      %v1029 = vrot.slane %v1028, 2
      %v1030 = vrot.slane %v701, 7
      %v1031 = vrot.slane %v1030, 2
      %v1032 = vrot.slane %v702, 7
      %v1033 = vrot.slane %v1032, 2
      %v1034 = vrot.slane %v703, 7
      %v1035 = vrot.slane %v1034, 2
      %v1036 = vrot.slane %v584, 7
      %v1037 = vrot.slane %v1036, 2
      %v1038 = vrot.slane %v704, 7
      %v1039 = vrot.slane %v1038, 2
      %v1040 = vrot.slane %v705, 7
      %v1041 = vrot.slane %v1040, 2
      %v1042 = vrot.slane %v706, 7
      %v1043 = vrot.slane %v1042, 2
      %v1044 = vrot.slane %v585, 7
      %v1045 = vrot.slane %v1044, 2
      %v1046 = vrot.slane %v707, 7
      %v1047 = vrot.slane %v1046, 2
      %v1048 = vrot.slane %v708, 7
      %v1049 = vrot.slane %v1048, 2
      %v1050 = vrot.slane %v709, 7
      %v1051 = vrot.slane %v1050, 2
      %v1052 = vrot.slane %v586, 7
      %v1053 = vrot.slane %v1052, 2
      %v1054 = vrot.slane %v710, 7
      %v1055 = vrot.slane %v1054, 2
      %v1056 = vrot.slane %v711, 7
      %v1057 = vrot.slane %v1056, 2
      %v1058 = vrot.slane %v712, 7
      %v1059 = vrot.slane %v1058, 2
      %v1060 = vrot.slane %v587, 7
      %v1061 = vrot.slane %v1060, 2
      %v1062 = vrot.slane %v713, 7
      %v1063 = vrot.slane %v1062, 2
      %v1064 = vrot.slane %v714, 7
      %v1065 = vrot.slane %v1064, 2
      %v1066 = vrot.slane %v715, 7
      %v1067 = vrot.slane %v1066, 2
      %v1196 = vmax.f32 %v556, %v813
      %v1197 = vmax.f32 %v620, %v815
      %v1198 = vmax.f32 %v621, %v817
      %v1199 = vmax.f32 %v622, %v819
      %v1200 = vmax.f32 %v557, %v821
      %v1201 = vmax.f32 %v623, %v823
      %v1202 = vmax.f32 %v624, %v825
      %v1203 = vmax.f32 %v625, %v827
      %v1204 = vmax.f32 %v558, %v829
      %v1205 = vmax.f32 %v626, %v831
      %v1206 = vmax.f32 %v627, %v833
      %v1207 = vmax.f32 %v628, %v835
      %v1208 = vmax.f32 %v559, %v837
      %v1209 = vmax.f32 %v629, %v839
      %v1210 = vmax.f32 %v630, %v841
      %v1211 = vmax.f32 %v631, %v843
      %v1212 = vmax.f32 %v560, %v845
      %v1213 = vmax.f32 %v632, %v847
      %v1214 = vmax.f32 %v633, %v849
      %v1215 = vmax.f32 %v634, %v851
      %v1216 = vmax.f32 %v561, %v853
      %v1217 = vmax.f32 %v635, %v855
      %v1218 = vmax.f32 %v636, %v857
      %v1219 = vmax.f32 %v637, %v859
      %v1220 = vmax.f32 %v562, %v861
      %v1221 = vmax.f32 %v638, %v863
      %v1222 = vmax.f32 %v639, %v865
      %v1223 = vmax.f32 %v640, %v867
      %v1224 = vmax.f32 %v563, %v869
      %v1225 = vmax.f32 %v641, %v871
      %v1226 = vmax.f32 %v642, %v873
      %v1227 = vmax.f32 %v643, %v875
      %v1228 = vmax.f32 %v564, %v877
      %v1229 = vmax.f32 %v644, %v879
      %v1230 = vmax.f32 %v645, %v881
      %v1231 = vmax.f32 %v646, %v883
      %v1232 = vmax.f32 %v565, %v885
      %v1233 = vmax.f32 %v647, %v887
      %v1234 = vmax.f32 %v648, %v889
      %v1235 = vmax.f32 %v649, %v891
      %v1236 = vmax.f32 %v566, %v893
      %v1237 = vmax.f32 %v650, %v895
      %v1238 = vmax.f32 %v651, %v897
      %v1239 = vmax.f32 %v652, %v899
      %v1240 = vmax.f32 %v567, %v901
      %v1241 = vmax.f32 %v653, %v903
      %v1242 = vmax.f32 %v654, %v905
      %v1243 = vmax.f32 %v655, %v907
      %v1244 = vmax.f32 %v568, %v909
      %v1245 = vmax.f32 %v656, %v911
      %v1246 = vmax.f32 %v657, %v913
      %v1247 = vmax.f32 %v658, %v915
      %v1248 = vmax.f32 %v569, %v917
      %v1249 = vmax.f32 %v659, %v919
      %v1250 = vmax.f32 %v660, %v921
      %v1251 = vmax.f32 %v661, %v923
      %v1252 = vmax.f32 %v570, %v925
      %v1253 = vmax.f32 %v662, %v927
      %v1254 = vmax.f32 %v663, %v929
      %v1255 = vmax.f32 %v664, %v931
      %v1256 = vmax.f32 %v571, %v933
      %v1257 = vmax.f32 %v665, %v935
      %v1258 = vmax.f32 %v666, %v937
      %v1259 = vmax.f32 %v667, %v939
      %v1260 = vmax.f32 %v572, %v941
      %v1261 = vmax.f32 %v668, %v943
      %v1262 = vmax.f32 %v669, %v945
      %v1263 = vmax.f32 %v670, %v947
      %v1264 = vmax.f32 %v573, %v949
      %v1265 = vmax.f32 %v671, %v951
      %v1266 = vmax.f32 %v672, %v953
      %v1267 = vmax.f32 %v673, %v955
      %v1268 = vmax.f32 %v574, %v957
      %v1269 = vmax.f32 %v674, %v959
      %v1270 = vmax.f32 %v675, %v961
      %v1271 = vmax.f32 %v676, %v963
      %v1272 = vmax.f32 %v575, %v965
      %v1273 = vmax.f32 %v677, %v967
      %v1274 = vmax.f32 %v678, %v969
      %v1275 = vmax.f32 %v679, %v971
      %v1276 = vmax.f32 %v576, %v973
      %v1277 = vmax.f32 %v680, %v975
      %v1278 = vmax.f32 %v681, %v977
      %v1279 = vmax.f32 %v682, %v979
      %v1280 = vmax.f32 %v577, %v981
      %v1281 = vmax.f32 %v683, %v983
      %v1282 = vmax.f32 %v684, %v985
      %v1283 = vmax.f32 %v685, %v987
      %v1284 = vmax.f32 %v578, %v989
      %v1285 = vmax.f32 %v686, %v991
      %v1286 = vmax.f32 %v687, %v993
      %v1287 = vmax.f32 %v688, %v995
      %v1288 = vmax.f32 %v579, %v997
      %v1289 = vmax.f32 %v689, %v999
      %v1290 = vmax.f32 %v690, %v1001
      %v1291 = vmax.f32 %v691, %v1003
      %v1292 = vmax.f32 %v580, %v1005
      %v1293 = vmax.f32 %v692, %v1007
      %v1294 = vmax.f32 %v693, %v1009
      %v1295 = vmax.f32 %v694, %v1011
      %v1296 = vmax.f32 %v581, %v1013
      %v1297 = vmax.f32 %v695, %v1015
      %v1298 = vmax.f32 %v696, %v1017
      %v1299 = vmax.f32 %v697, %v1019
      %v1300 = vmax.f32 %v582, %v1021
      %v1301 = vmax.f32 %v698, %v1023
      %v1302 = vmax.f32 %v699, %v1025
      %v1303 = vmax.f32 %v700, %v1027
      %v1304 = vmax.f32 %v583, %v1029
      %v1305 = vmax.f32 %v701, %v1031
      %v1306 = vmax.f32 %v702, %v1033
      %v1307 = vmax.f32 %v703, %v1035
      %v1308 = vmax.f32 %v584, %v1037
      %v1309 = vmax.f32 %v704, %v1039
      %v1310 = vmax.f32 %v705, %v1041
      %v1311 = vmax.f32 %v706, %v1043
      %v1312 = vmax.f32 %v585, %v1045
      %v1313 = vmax.f32 %v707, %v1047
      %v1314 = vmax.f32 %v708, %v1049
      %v1315 = vmax.f32 %v709, %v1051
      %v1316 = vmax.f32 %v586, %v1053
      %v1317 = vmax.f32 %v710, %v1055
      %v1318 = vmax.f32 %v711, %v1057
      %v1319 = vmax.f32 %v712, %v1059
      %v1320 = vmax.f32 %v587, %v1061
      %v1321 = vmax.f32 %v713, %v1063
      %v1322 = vmax.f32 %v714, %v1065
      %v1323 = vmax.f32 %v715, %v1067
      %v1324 = vmax.f32 %v1196, %v1204
      %v1325 = vmax.f32 %v1197, %v1205
      %v1326 = vmax.f32 %v1198, %v1206
      %v1327 = vmax.f32 %v1199, %v1207
      %v1328 = vmax.f32 %v1200, %v1208
      %v1329 = vmax.f32 %v1201, %v1209
      %v1330 = vmax.f32 %v1202, %v1210
      %v1331 = vmax.f32 %v1203, %v1211
      %v1332 = vmax.f32 %v1212, %v1220
      %v1333 = vmax.f32 %v1213, %v1221
      %v1334 = vmax.f32 %v1214, %v1222
      %v1335 = vmax.f32 %v1215, %v1223
      %v1336 = vmax.f32 %v1216, %v1224
      %v1337 = vmax.f32 %v1217, %v1225
      %v1338 = vmax.f32 %v1218, %v1226
      %v1339 = vmax.f32 %v1219, %v1227
      %v1340 = vmax.f32 %v1228, %v1236
      %v1341 = vmax.f32 %v1229, %v1237
      %v1342 = vmax.f32 %v1230, %v1238
      %v1343 = vmax.f32 %v1231, %v1239
      %v1344 = vmax.f32 %v1232, %v1240
      %v1345 = vmax.f32 %v1233, %v1241
      %v1346 = vmax.f32 %v1234, %v1242
      %v1347 = vmax.f32 %v1235, %v1243
      %v1348 = vmax.f32 %v1244, %v1252
      %v1349 = vmax.f32 %v1245, %v1253
      %v1350 = vmax.f32 %v1246, %v1254
      %v1351 = vmax.f32 %v1247, %v1255
      %v1352 = vmax.f32 %v1248, %v1256
      %v1353 = vmax.f32 %v1249, %v1257
      %v1354 = vmax.f32 %v1250, %v1258
      %v1355 = vmax.f32 %v1251, %v1259
      %v1356 = vmax.f32 %v1260, %v1268
      %v1357 = vmax.f32 %v1261, %v1269
      %v1358 = vmax.f32 %v1262, %v1270
      %v1359 = vmax.f32 %v1263, %v1271
      %v1360 = vmax.f32 %v1264, %v1272
      %v1361 = vmax.f32 %v1265, %v1273
      %v1362 = vmax.f32 %v1266, %v1274
      %v1363 = vmax.f32 %v1267, %v1275
      %v1364 = vmax.f32 %v1276, %v1284
      %v1365 = vmax.f32 %v1277, %v1285
      %v1366 = vmax.f32 %v1278, %v1286
      %v1367 = vmax.f32 %v1279, %v1287
      %v1368 = vmax.f32 %v1280, %v1288
      %v1369 = vmax.f32 %v1281, %v1289
      %v1370 = vmax.f32 %v1282, %v1290
      %v1371 = vmax.f32 %v1283, %v1291
      %v1372 = vmax.f32 %v1292, %v1300
      %v1373 = vmax.f32 %v1293, %v1301
      %v1374 = vmax.f32 %v1294, %v1302
      %v1375 = vmax.f32 %v1295, %v1303
      %v1376 = vmax.f32 %v1296, %v1304
      %v1377 = vmax.f32 %v1297, %v1305
      %v1378 = vmax.f32 %v1298, %v1306
      %v1379 = vmax.f32 %v1299, %v1307
      %v1380 = vmax.f32 %v1308, %v1316
      %v1381 = vmax.f32 %v1309, %v1317
      %v1382 = vmax.f32 %v1310, %v1318
      %v1383 = vmax.f32 %v1311, %v1319
      %v1384 = vmax.f32 %v1312, %v1320
      %v1385 = vmax.f32 %v1313, %v1321
      %v1386 = vmax.f32 %v1314, %v1322
      %v1387 = vmax.f32 %v1315, %v1323
      %vm1388 = vcmask 519168
      %1389 = vst.msk [vmem:[#allocation2] sm:$0xf] %vm1388, 0
      %vm1390 = vcmask 516096
      %1391 = vst.msk [vmem:[#allocation2 + $0x4] sm:$0x1] %vm1390, 0
      %s1392 = scalar_lea.vmem [#allocation2], 72
      %1393 = vst.msk [vmem:[%s1392] sm:$0xf] %vm1388, 0
      %1394 = vst.msk [vmem:[%s1392 + $0x4] sm:$0x1] %vm1390, 0
      %vm1395 = vcmask 516096
      %vm1396 = vsmask.f32 256
      %vm1397 = vmand %vm1395, %vm1396
      %v1398 = vld [vmem:[#allocation2] sm:$0x1]
      %v1399 = vsel %vm1397, 0, %v1398
      %1400 = vst [vmem:[#allocation2] sm:$0x1] %v1399
      %v1401 = vld [vmem:[#allocation2 + $0x8] sm:$0x1]
      %v1402 = vsel %vm1397, 0, %v1401
      %1403 = vst [vmem:[#allocation2 + $0x8] sm:$0x1] %v1402
      %v1404 = vld [vmem:[#allocation2 + $0x10] sm:$0x1]
      %v1405 = vsel %vm1397, 0, %v1404
      %1406 = vst [vmem:[#allocation2 + $0x10] sm:$0x1] %v1405
      %v1407 = vld [vmem:[#allocation2 + $0x18] sm:$0x1]
      %v1408 = vsel %vm1397, 0, %v1407
      %1409 = vst [vmem:[#allocation2 + $0x18] sm:$0x1] %v1408
      %v1410 = vld [vmem:[#allocation2 + $0x20] sm:$0x1]
      %v1411 = vsel %vm1397, 0, %v1410
      %1412 = vst [vmem:[#allocation2 + $0x20] sm:$0x1] %v1411
      %v1413 = vld [vmem:[#allocation2 + $0x28] sm:$0x1]
      %v1414 = vsel %vm1397, 0, %v1413
      %1415 = vst [vmem:[#allocation2 + $0x28] sm:$0x1] %v1414
      %v1416 = vld [vmem:[#allocation2 + $0x30] sm:$0x1]
      %v1417 = vsel %vm1397, 0, %v1416
      %1418 = vst [vmem:[#allocation2 + $0x30] sm:$0x1] %v1417
      %v1419 = vld [vmem:[#allocation2 + $0x38] sm:$0x1]
      %v1420 = vsel %vm1397, 0, %v1419
      %1421 = vst [vmem:[#allocation2 + $0x38] sm:$0x1] %v1420
      %v1422 = vld [vmem:[#allocation2 + $0x40] sm:$0x1]
      %v1423 = vsel %vm1397, 0, %v1422
      %1424 = vst [vmem:[#allocation2 + $0x40] sm:$0x1] %v1423
      %v1425 = vld [vmem:[#allocation2 + $0x48] sm:$0x1]
      %v1426 = vsel %vm1397, 0, %v1425
      %1427 = vst [vmem:[#allocation2 + $0x48] sm:$0x1] %v1426
      %vm1428 = vsmask.f32 7938
      %vm1429 = vmand %vm1395, %vm1428
      %v1430 = vld [vmem:[#allocation2 + $0x4] sm:$0x1]
      %v1431 = vsel %vm1429, 0, %v1430
      %1432 = vst [vmem:[#allocation2 + $0x4] sm:$0x1] %v1431
      %v1433 = vld [vmem:[#allocation2 + $0xc] sm:$0x1]
      %v1434 = vsel %vm1429, 0, %v1433
      %1435 = vst [vmem:[#allocation2 + $0xc] sm:$0x1] %v1434
      %v1436 = vld [vmem:[#allocation2 + $0x14] sm:$0x1]
      %v1437 = vsel %vm1429, 0, %v1436
      %1438 = vst [vmem:[#allocation2 + $0x14] sm:$0x1] %v1437
      %v1439 = vld [vmem:[#allocation2 + $0x1c] sm:$0x1]
      %v1440 = vsel %vm1429, 0, %v1439
      %1441 = vst [vmem:[#allocation2 + $0x1c] sm:$0x1] %v1440
      %v1442 = vld [vmem:[#allocation2 + $0x24] sm:$0x1]
      %v1443 = vsel %vm1429, 0, %v1442
      %1444 = vst [vmem:[#allocation2 + $0x24] sm:$0x1] %v1443
      %v1445 = vld [vmem:[#allocation2 + $0x2c] sm:$0x1]
      %v1446 = vsel %vm1429, 0, %v1445
      %1447 = vst [vmem:[#allocation2 + $0x2c] sm:$0x1] %v1446
      %v1448 = vld [vmem:[#allocation2 + $0x34] sm:$0x1]
      %v1449 = vsel %vm1429, 0, %v1448
      %1450 = vst [vmem:[#allocation2 + $0x34] sm:$0x1] %v1449
      %v1451 = vld [vmem:[#allocation2 + $0x3c] sm:$0x1]
      %v1452 = vsel %vm1429, 0, %v1451
      %1453 = vst [vmem:[#allocation2 + $0x3c] sm:$0x1] %v1452
      %v1454 = vld [vmem:[#allocation2 + $0x44] sm:$0x1]
      %v1455 = vsel %vm1429, 0, %v1454
      %1456 = vst [vmem:[#allocation2 + $0x44] sm:$0x1] %v1455
      %v1457 = vld [vmem:[#allocation2 + $0x4c] sm:$0x1]
      %v1458 = vsel %vm1429, 0, %v1457
      %1459 = vst [vmem:[#allocation2 + $0x4c] sm:$0x1] %v1458
      %v1460 = vpack.c.bf16 %v1324, %v1324
      %v1461 = vpack.c.bf16 %v1325, %v1325
      %v1462 = vpack.c.bf16 %v1326, %v1326
      %v1463 = vpack.c.bf16 %v1327, %v1327
      %v1464 = vpack.c.bf16 %v1328, %v1328
      %v1465 = vpack.c.bf16 %v1329, %v1329
      %v1466 = vpack.c.bf16 %v1330, %v1330
      %v1467 = vpack.c.bf16 %v1331, %v1331
      %v1468 = vpack.c.bf16 %v1332, %v1332
      %v1469 = vpack.c.bf16 %v1333, %v1333
      %v1470 = vpack.c.bf16 %v1334, %v1334
      %v1471 = vpack.c.bf16 %v1335, %v1335
      %v1472 = vpack.c.bf16 %v1336, %v1336
      %v1473 = vpack.c.bf16 %v1337, %v1337
      %v1474 = vpack.c.bf16 %v1338, %v1338
      %v1475 = vpack.c.bf16 %v1339, %v1339
      %v1476 = vpack.c.bf16 %v1340, %v1340
      %v1477 = vpack.c.bf16 %v1341, %v1341
      %v1478 = vpack.c.bf16 %v1342, %v1342
      %v1479 = vpack.c.bf16 %v1343, %v1343
      %v1480 = vpack.c.bf16 %v1344, %v1344
      %v1481 = vpack.c.bf16 %v1345, %v1345
      %v1482 = vpack.c.bf16 %v1346, %v1346
      %v1483 = vpack.c.bf16 %v1347, %v1347
      %v1484 = vpack.c.bf16 %v1348, %v1348
      %v1485 = vpack.c.bf16 %v1349, %v1349
      %v1486 = vpack.c.bf16 %v1350, %v1350
      %v1487 = vpack.c.bf16 %v1351, %v1351
      %v1488 = vpack.c.bf16 %v1352, %v1352
      %v1489 = vpack.c.bf16 %v1353, %v1353
      %v1490 = vpack.c.bf16 %v1354, %v1354
      %v1491 = vpack.c.bf16 %v1355, %v1355
      %v1492 = vpack.c.bf16 %v1356, %v1356
      %v1493 = vpack.c.bf16 %v1357, %v1357
      %v1494 = vpack.c.bf16 %v1358, %v1358
      %v1495 = vpack.c.bf16 %v1359, %v1359
      %v1496 = vpack.c.bf16 %v1360, %v1360
      %v1497 = vpack.c.bf16 %v1361, %v1361
      %v1498 = vpack.c.bf16 %v1362, %v1362
      %v1499 = vpack.c.bf16 %v1363, %v1363
      %v1500 = vpack.c.bf16 %v1364, %v1364
      %v1501 = vpack.c.bf16 %v1365, %v1365
      %v1502 = vpack.c.bf16 %v1366, %v1366
      %v1503 = vpack.c.bf16 %v1367, %v1367
      %v1504 = vpack.c.bf16 %v1368, %v1368
      %v1505 = vpack.c.bf16 %v1369, %v1369
      %v1506 = vpack.c.bf16 %v1370, %v1370
      %v1507 = vpack.c.bf16 %v1371, %v1371
      %v1508 = vpack.c.bf16 %v1372, %v1372
      %v1509 = vpack.c.bf16 %v1373, %v1373
      %v1510 = vpack.c.bf16 %v1374, %v1374
      %v1511 = vpack.c.bf16 %v1375, %v1375
      %v1512 = vpack.c.bf16 %v1376, %v1376
      %v1513 = vpack.c.bf16 %v1377, %v1377
      %v1514 = vpack.c.bf16 %v1378, %v1378
      %v1515 = vpack.c.bf16 %v1379, %v1379
      %v1516 = vpack.c.bf16 %v1380, %v1380
      %v1517 = vpack.c.bf16 %v1381, %v1381
      %v1518 = vpack.c.bf16 %v1382, %v1382
      %v1519 = vpack.c.bf16 %v1383, %v1383
      %v1520 = vpack.c.bf16 %v1384, %v1384
      %v1521 = vpack.c.bf16 %v1385, %v1385
      %v1522 = vpack.c.bf16 %v1386, %v1386
      %v1523 = vpack.c.bf16 %v1387, %v1387
      %v1588 = vunpack.c.l.b16 %v1460
      %v1589 = vunpack.c.l.b16 %v1461
      %v1590 = vunpack.c.l.b16 %v1462
      %v1591 = vunpack.c.l.b16 %v1463
      %v1592 = vunpack.c.l.b16 %v1464
      %v1593 = vunpack.c.l.b16 %v1465
      %v1594 = vunpack.c.l.b16 %v1466
      %v1595 = vunpack.c.l.b16 %v1467
      %v1596 = vunpack.c.l.b16 %v1468
      %v1597 = vunpack.c.l.b16 %v1469
      %v1598 = vunpack.c.l.b16 %v1470
      %v1599 = vunpack.c.l.b16 %v1471
      %v1600 = vunpack.c.l.b16 %v1472
      %v1601 = vunpack.c.l.b16 %v1473
      %v1602 = vunpack.c.l.b16 %v1474
      %v1603 = vunpack.c.l.b16 %v1475
      %v1604 = vunpack.c.l.b16 %v1476
      %v1605 = vunpack.c.l.b16 %v1477
      %v1606 = vunpack.c.l.b16 %v1478
      %v1607 = vunpack.c.l.b16 %v1479
      %v1608 = vunpack.c.l.b16 %v1480
      %v1609 = vunpack.c.l.b16 %v1481
      %v1610 = vunpack.c.l.b16 %v1482
      %v1611 = vunpack.c.l.b16 %v1483
      %v1612 = vunpack.c.l.b16 %v1484
      %v1613 = vunpack.c.l.b16 %v1485
      %v1614 = vunpack.c.l.b16 %v1486
      %v1615 = vunpack.c.l.b16 %v1487
      %v1616 = vunpack.c.l.b16 %v1488
      %v1617 = vunpack.c.l.b16 %v1489
      %v1618 = vunpack.c.l.b16 %v1490
      %v1619 = vunpack.c.l.b16 %v1491
      %v1620 = vunpack.c.l.b16 %v1492
      %v1621 = vunpack.c.l.b16 %v1493
      %v1622 = vunpack.c.l.b16 %v1494
      %v1623 = vunpack.c.l.b16 %v1495
      %v1624 = vunpack.c.l.b16 %v1496
      %v1625 = vunpack.c.l.b16 %v1497
      %v1626 = vunpack.c.l.b16 %v1498
      %v1627 = vunpack.c.l.b16 %v1499
      %v1628 = vunpack.c.l.b16 %v1500
      %v1629 = vunpack.c.l.b16 %v1501
      %v1630 = vunpack.c.l.b16 %v1502
      %v1631 = vunpack.c.l.b16 %v1503
      %v1632 = vunpack.c.l.b16 %v1504
      %v1633 = vunpack.c.l.b16 %v1505
      %v1634 = vunpack.c.l.b16 %v1506
      %v1635 = vunpack.c.l.b16 %v1507
      %v1636 = vunpack.c.l.b16 %v1508
      %v1637 = vunpack.c.l.b16 %v1509
      %v1638 = vunpack.c.l.b16 %v1510
      %v1639 = vunpack.c.l.b16 %v1511
      %v1640 = vunpack.c.l.b16 %v1512
      %v1641 = vunpack.c.l.b16 %v1513
      %v1642 = vunpack.c.l.b16 %v1514
      %v1643 = vunpack.c.l.b16 %v1515
      %v1644 = vunpack.c.l.b16 %v1516
      %v1645 = vunpack.c.l.b16 %v1517
      %v1646 = vunpack.c.l.b16 %v1518
      %v1647 = vunpack.c.l.b16 %v1519
      %v1648 = vunpack.c.l.b16 %v1520
      %v1649 = vunpack.c.l.b16 %v1521
      %v1650 = vunpack.c.l.b16 %v1522
      %v1651 = vunpack.c.l.b16 %v1523
      %v1652 = vrot.slane %v1588, 7
      %v1653 = vrot.slane %v1589, 6
      %vm1654 = vcmask 1042434
      %v1655 = vsel %vm1654, %v1653, %v1652
      %v1656 = vrot.slane %v1590, 5
      %vm1657 = vcmask 1043459
      %v1658 = vsel %vm1657, %v1656, %v1655
      %v1659 = vrot.slane %v1591, 4
      %vm1660 = vcmask 1044484
      %v1661 = vsel %vm1660, %v1659, %v1658
      %v1662 = vrot.slane %v1592, 3
      %vm1663 = vcmask 1045509
      %v1664 = vsel %vm1663, %v1662, %v1661
      %v1665 = vrot.slane %v1593, 2
      %vm1666 = vcmask 1046534
      %v1667 = vsel %vm1666, %v1665, %v1664
      %v1668 = vrot.slane %v1594, 1
      %vm1669 = vcmask 1047559
      %v1670 = vsel %vm1669, %v1668, %v1667
      %v1671 = vrot.slane %v1596, 7
      %v1672 = vrot.slane %v1597, 6
      %v1673 = vsel %vm1654, %v1672, %v1671
      %v1674 = vrot.slane %v1598, 5
      %v1675 = vsel %vm1657, %v1674, %v1673
      %v1676 = vrot.slane %v1599, 4
      %v1677 = vsel %vm1660, %v1676, %v1675
      %v1678 = vrot.slane %v1600, 3
      %v1679 = vsel %vm1663, %v1678, %v1677
      %v1680 = vrot.slane %v1601, 2
      %v1681 = vsel %vm1666, %v1680, %v1679
      %v1682 = vrot.slane %v1602, 1
      %v1683 = vsel %vm1669, %v1682, %v1681
      %v1684 = vrot.slane %v1604, 7
      %v1685 = vrot.slane %v1605, 6
      %v1686 = vsel %vm1654, %v1685, %v1684
      %v1687 = vrot.slane %v1606, 5
      %v1688 = vsel %vm1657, %v1687, %v1686
      %v1689 = vrot.slane %v1607, 4
      %v1690 = vsel %vm1660, %v1689, %v1688
      %v1691 = vrot.slane %v1608, 3
      %v1692 = vsel %vm1663, %v1691, %v1690
      %v1693 = vrot.slane %v1609, 2
      %v1694 = vsel %vm1666, %v1693, %v1692
      %v1695 = vrot.slane %v1610, 1
      %v1696 = vsel %vm1669, %v1695, %v1694
      %v1697 = vrot.slane %v1612, 7
      %v1698 = vrot.slane %v1613, 6
      %v1699 = vsel %vm1654, %v1698, %v1697
      %v1700 = vrot.slane %v1614, 5
      %v1701 = vsel %vm1657, %v1700, %v1699
      %v1702 = vrot.slane %v1615, 4
      %v1703 = vsel %vm1660, %v1702, %v1701
      %v1704 = vrot.slane %v1616, 3
      %v1705 = vsel %vm1663, %v1704, %v1703
      %v1706 = vrot.slane %v1617, 2
      %v1707 = vsel %vm1666, %v1706, %v1705
      %v1708 = vrot.slane %v1618, 1
      %v1709 = vsel %vm1669, %v1708, %v1707
      %v1710 = vrot.slane %v1620, 7
      %v1711 = vrot.slane %v1621, 6
      %v1712 = vsel %vm1654, %v1711, %v1710
      %v1713 = vrot.slane %v1622, 5
      %v1714 = vsel %vm1657, %v1713, %v1712
      %v1715 = vrot.slane %v1623, 4
      %v1716 = vsel %vm1660, %v1715, %v1714
      %v1717 = vrot.slane %v1624, 3
      %v1718 = vsel %vm1663, %v1717, %v1716
      %v1719 = vrot.slane %v1625, 2
      %v1720 = vsel %vm1666, %v1719, %v1718
      %v1721 = vrot.slane %v1626, 1
      %v1722 = vsel %vm1669, %v1721, %v1720
      %v1723 = vrot.slane %v1628, 7
      %v1724 = vrot.slane %v1629, 6
      %v1725 = vsel %vm1654, %v1724, %v1723
      %v1726 = vrot.slane %v1630, 5
      %v1727 = vsel %vm1657, %v1726, %v1725
      %v1728 = vrot.slane %v1631, 4
      %v1729 = vsel %vm1660, %v1728, %v1727
      %v1730 = vrot.slane %v1632, 3
      %v1731 = vsel %vm1663, %v1730, %v1729
      %v1732 = vrot.slane %v1633, 2
      %v1733 = vsel %vm1666, %v1732, %v1731
      %v1734 = vrot.slane %v1634, 1
      %v1735 = vsel %vm1669, %v1734, %v1733
      %v1736 = vrot.slane %v1636, 7
      %v1737 = vrot.slane %v1637, 6
      %v1738 = vsel %vm1654, %v1737, %v1736
      %v1739 = vrot.slane %v1638, 5
      %v1740 = vsel %vm1657, %v1739, %v1738
      %v1741 = vrot.slane %v1639, 4
      %v1742 = vsel %vm1660, %v1741, %v1740
      %v1743 = vrot.slane %v1640, 3
      %v1744 = vsel %vm1663, %v1743, %v1742
      %v1745 = vrot.slane %v1641, 2
      %v1746 = vsel %vm1666, %v1745, %v1744
      %v1747 = vrot.slane %v1642, 1
      %v1748 = vsel %vm1669, %v1747, %v1746
      %v1749 = vrot.slane %v1644, 7
      %v1750 = vrot.slane %v1645, 6
      %v1751 = vsel %vm1654, %v1750, %v1749
      %v1752 = vrot.slane %v1646, 5
      %v1753 = vsel %vm1657, %v1752, %v1751
      %v1754 = vrot.slane %v1647, 4
      %v1755 = vsel %vm1660, %v1754, %v1753
      %v1756 = vrot.slane %v1648, 3
      %v1757 = vsel %vm1663, %v1756, %v1755
      %v1758 = vrot.slane %v1649, 2
      %v1759 = vsel %vm1666, %v1758, %v1757
      %v1760 = vrot.slane %v1650, 1
      %v1761 = vsel %vm1669, %v1760, %v1759
      %v1762 = vpack.c.b16 %v1670, %v1670
      %v1763 = vpack.c.b16 %v1595, %v1595
      %v1764 = vpack.c.b16 %v1683, %v1683
      %v1765 = vpack.c.b16 %v1603, %v1603
      %v1766 = vpack.c.b16 %v1696, %v1696
      %v1767 = vpack.c.b16 %v1611, %v1611
      %v1768 = vpack.c.b16 %v1709, %v1709
      %v1769 = vpack.c.b16 %v1619, %v1619
      %v1770 = vpack.c.b16 %v1722, %v1722
      %v1771 = vpack.c.b16 %v1627, %v1627
      %v1772 = vpack.c.b16 %v1735, %v1735
      %v1773 = vpack.c.b16 %v1635, %v1635
      %v1774 = vpack.c.b16 %v1748, %v1748
      %v1775 = vpack.c.b16 %v1643, %v1643
      %v1776 = vpack.c.b16 %v1761, %v1761
      %v1777 = vpack.c.b16 %v1651, %v1651
      %s1794 = scalar_lea.vmem [#allocation2], 8
      %vm1795 = vcmask 519168
      %vm1796 = vmand %vm1795, %vm1428
      %v1797 = vld [vmem:[%s1794] sm:$0xf]
      %v1798 = vsel %vm1796, %v1762, %v1797
      %1799 = vst [vmem:[%s1794] sm:$0xf] %v1798
      %v1800 = vld [vmem:[%s1794 + $0x4] sm:$0x1]
      %v1801 = vsel %vm1397, %v1763, %v1800
      %1802 = vst [vmem:[%s1794 + $0x4] sm:$0x1] %v1801
      %v1803 = vld [vmem:[%s1794 + $0x8] sm:$0xf]
      %v1804 = vsel %vm1796, %v1764, %v1803
      %1805 = vst [vmem:[%s1794 + $0x8] sm:$0xf] %v1804
      %v1806 = vld [vmem:[%s1794 + $0xc] sm:$0x1]
      %v1807 = vsel %vm1397, %v1765, %v1806
      %1808 = vst [vmem:[%s1794 + $0xc] sm:$0x1] %v1807
      %v1809 = vld [vmem:[%s1794 + $0x10] sm:$0xf]
      %v1810 = vsel %vm1796, %v1766, %v1809
      %1811 = vst [vmem:[%s1794 + $0x10] sm:$0xf] %v1810
      %v1812 = vld [vmem:[%s1794 + $0x14] sm:$0x1]
      %v1813 = vsel %vm1397, %v1767, %v1812
      %1814 = vst [vmem:[%s1794 + $0x14] sm:$0x1] %v1813
      %v1815 = vld [vmem:[%s1794 + $0x18] sm:$0xf]
      %v1816 = vsel %vm1796, %v1768, %v1815
      %1817 = vst [vmem:[%s1794 + $0x18] sm:$0xf] %v1816
      %v1818 = vld [vmem:[%s1794 + $0x1c] sm:$0x1]
      %v1819 = vsel %vm1397, %v1769, %v1818
      %1820 = vst [vmem:[%s1794 + $0x1c] sm:$0x1] %v1819
      %v1821 = vld [vmem:[%s1794 + $0x20] sm:$0xf]
      %v1822 = vsel %vm1796, %v1770, %v1821
      %1823 = vst [vmem:[%s1794 + $0x20] sm:$0xf] %v1822
      %v1824 = vld [vmem:[%s1794 + $0x24] sm:$0x1]
      %v1825 = vsel %vm1397, %v1771, %v1824
      %1826 = vst [vmem:[%s1794 + $0x24] sm:$0x1] %v1825
      %v1827 = vld [vmem:[%s1794 + $0x28] sm:$0xf]
      %v1828 = vsel %vm1796, %v1772, %v1827
      %1829 = vst [vmem:[%s1794 + $0x28] sm:$0xf] %v1828
      %v1830 = vld [vmem:[%s1794 + $0x2c] sm:$0x1]
      %v1831 = vsel %vm1397, %v1773, %v1830
      %1832 = vst [vmem:[%s1794 + $0x2c] sm:$0x1] %v1831
      %v1833 = vld [vmem:[%s1794 + $0x30] sm:$0xf]
      %v1834 = vsel %vm1796, %v1774, %v1833
      %1835 = vst [vmem:[%s1794 + $0x30] sm:$0xf] %v1834
      %v1836 = vld [vmem:[%s1794 + $0x34] sm:$0x1]
      %v1837 = vsel %vm1397, %v1775, %v1836
      %1838 = vst [vmem:[%s1794 + $0x34] sm:$0x1] %v1837
      %v1839 = vld [vmem:[%s1794 + $0x38] sm:$0xf]
      %v1840 = vsel %vm1796, %v1776, %v1839
      %1841 = vst [vmem:[%s1794 + $0x38] sm:$0xf] %v1840
      %v1842 = vld [vmem:[%s1794 + $0x3c] sm:$0x1]
      %v1843 = vsel %vm1397, %v1777, %v1842
      %1844 = vst [vmem:[%s1794 + $0x3c] sm:$0x1] %v1843
      %v1845 = vld [vmem:[#allocation2] sm:$0xf]
      %v1846 = vld [vmem:[#allocation2 + $0x4] sm:$0x1]
      %v1847 = vld [vmem:[#allocation2 + $0x8] sm:$0xf]
      %v1848 = vld [vmem:[#allocation2 + $0xc] sm:$0x1]
      %v1849 = vld [vmem:[#allocation2 + $0x10] sm:$0xf]
      %v1850 = vld [vmem:[#allocation2 + $0x14] sm:$0x1]
      %v1851 = vld [vmem:[#allocation2 + $0x18] sm:$0xf]
      %v1852 = vld [vmem:[#allocation2 + $0x1c] sm:$0x1]
      %v1853 = vld [vmem:[#allocation2 + $0x20] sm:$0xf]
      %v1854 = vld [vmem:[#allocation2 + $0x24] sm:$0x1]
      %v1855 = vld [vmem:[#allocation2 + $0x28] sm:$0xf]
      %v1856 = vld [vmem:[#allocation2 + $0x2c] sm:$0x1]
      %v1857 = vld [vmem:[#allocation2 + $0x30] sm:$0xf]
      %v1858 = vld [vmem:[#allocation2 + $0x34] sm:$0x1]
      %v1859 = vld [vmem:[#allocation2 + $0x38] sm:$0xf]
      %v1860 = vld [vmem:[#allocation2 + $0x3c] sm:$0x1]
      %v1861 = vld [vmem:[#allocation2 + $0x40] sm:$0xf]
      %v1862 = vld [vmem:[#allocation2 + $0x44] sm:$0x1]
      %v1863 = vld [vmem:[#allocation2 + $0x48] sm:$0xf]
      %v1864 = vld [vmem:[#allocation2 + $0x4c] sm:$0x1]
      %v1881 = vunpack.c.l.b16 %v1845
      %v1882 = vunpack.c.l.b16 %v1846
      %v1883 = vunpack.c.l.b16 %v1847
      %v1884 = vunpack.c.l.b16 %v1848
      %v1885 = vunpack.c.l.b16 %v1849
      %v1886 = vunpack.c.l.b16 %v1850
      %v1887 = vunpack.c.l.b16 %v1851
      %v1888 = vunpack.c.l.b16 %v1852
      %v1889 = vunpack.c.l.b16 %v1853
      %v1890 = vunpack.c.l.b16 %v1854
      %v1891 = vunpack.c.l.b16 %v1855
      %v1892 = vunpack.c.l.b16 %v1856
      %v1893 = vunpack.c.l.b16 %v1857
      %v1894 = vunpack.c.l.b16 %v1858
      %v1895 = vunpack.c.l.b16 %v1859
      %v1896 = vunpack.c.l.b16 %v1860
      %v1897 = vpack.c.b16 %v1882, %v1881
      %v1898 = vpack.c.b16 %v1884, %v1883
      %v1899 = vpack.c.b16 %v1886, %v1885
      %v1900 = vpack.c.b16 %v1888, %v1887
      %v1901 = vpack.c.b16 %v1890, %v1889
      %v1902 = vpack.c.b16 %v1892, %v1891
      %v1903 = vpack.c.b16 %v1894, %v1893
      %v1904 = vpack.c.b16 %v1896, %v1895
      %v1906 = vshrl.u32 %v1897, 16
      %v1908 = vshll.u32 %v1897, 16
      %v1910 = vrot.slane %v1908, 1
      %v1911 = vor.u32 %v1906, %v1910
      %v1913 = vshrl.u32 %v1898, 16
      %v1915 = vshll.u32 %v1898, 16
      %v1917 = vrot.slane %v1915, 1
      %v1918 = vor.u32 %v1913, %v1917
      %v1920 = vshrl.u32 %v1899, 16
      %v1922 = vshll.u32 %v1899, 16
      %v1924 = vrot.slane %v1922, 1
      %v1925 = vor.u32 %v1920, %v1924
      %v1927 = vshrl.u32 %v1900, 16
      %v1929 = vshll.u32 %v1900, 16
      %v1931 = vrot.slane %v1929, 1
      %v1932 = vor.u32 %v1927, %v1931
      %v1934 = vshrl.u32 %v1901, 16
      %v1936 = vshll.u32 %v1901, 16
      %v1938 = vrot.slane %v1936, 1
      %v1939 = vor.u32 %v1934, %v1938
      %v1941 = vshrl.u32 %v1902, 16
      %v1943 = vshll.u32 %v1902, 16
      %v1945 = vrot.slane %v1943, 1
      %v1946 = vor.u32 %v1941, %v1945
      %v1948 = vshrl.u32 %v1903, 16
      %v1950 = vshll.u32 %v1903, 16
      %v1952 = vrot.slane %v1950, 1
      %v1953 = vor.u32 %v1948, %v1952
      %v1955 = vshrl.u32 %v1904, 16
      %v1957 = vshll.u32 %v1904, 16
      %v1959 = vrot.slane %v1957, 1
      %v1960 = vor.u32 %v1955, %v1959
      %1961 = vrot.lane.b32.xlu0 %v1911, 64
      %v1962 = vpop.permute.xlu0 %1961
      %1963 = vrot.lane.b32.xlu0 %v1918, 64
      %v1964 = vpop.permute.xlu0 %1963
      %1965 = vrot.lane.b32.xlu0 %v1925, 64
      %v1966 = vpop.permute.xlu0 %1965
      %1967 = vrot.lane.b32.xlu0 %v1932, 64
      %v1968 = vpop.permute.xlu0 %1967
      %1969 = vrot.lane.b32.xlu0 %v1939, 64
      %v1970 = vpop.permute.xlu0 %1969
      %1971 = vrot.lane.b32.xlu0 %v1946, 64
      %v1972 = vpop.permute.xlu0 %1971
      %1973 = vrot.lane.b32.xlu0 %v1953, 64
      %v1974 = vpop.permute.xlu0 %1973
      %1975 = vrot.lane.b32.xlu0 %v1960, 64
      %v1976 = vpop.permute.xlu0 %1975
      %v1977 = vrot.slane %v1897, 1
      %v1978 = vrot.slane %v1898, 1
      %v1979 = vrot.slane %v1899, 1
      %v1980 = vrot.slane %v1900, 1
      %v1981 = vrot.slane %v1901, 1
      %v1982 = vrot.slane %v1902, 1
      %v1983 = vrot.slane %v1903, 1
      %v1984 = vrot.slane %v1904, 1
      %v1986 = vunpack.c.l.b16 %v1861
      %v1987 = vpack.c.b16 %v1883, %v1883
      %v1988 = vpack.c.b16 %v1885, %v1885
      %v1989 = vpack.c.b16 %v1887, %v1887
      %v1990 = vpack.c.b16 %v1889, %v1889
      %v1991 = vpack.c.b16 %v1891, %v1891
      %v1992 = vpack.c.b16 %v1893, %v1893
      %v1993 = vpack.c.b16 %v1895, %v1895
      %v1994 = vpack.c.b16 %v1986, %v1986
      %1995 = vrot.lane.b32.xlu0 %v1987, 64
      %v1996 = vpop.permute.xlu0 %1995
      %1997 = vrot.lane.b32.xlu0 %v1988, 64
      %v1998 = vpop.permute.xlu0 %1997
      %1999 = vrot.lane.b32.xlu0 %v1989, 64
      %v2000 = vpop.permute.xlu0 %1999
      %2001 = vrot.lane.b32.xlu0 %v1990, 64
      %v2002 = vpop.permute.xlu0 %2001
      %2003 = vrot.lane.b32.xlu0 %v1991, 64
      %v2004 = vpop.permute.xlu0 %2003
      %2005 = vrot.lane.b32.xlu0 %v1992, 64
      %v2006 = vpop.permute.xlu0 %2005
      %2007 = vrot.lane.b32.xlu0 %v1993, 64
      %v2008 = vpop.permute.xlu0 %2007
      %2009 = vrot.lane.b32.xlu0 %v1994, 64
      %v2010 = vpop.permute.xlu0 %2009
      %v2012 = vunpack.c.l.b16 %v1862
      %v2013 = vpack.c.b16 %v2012, %v1986
      %v2015 = vshrl.u32 %v2013, 16
      %v2017 = vshll.u32 %v2013, 16
      %v2019 = vrot.slane %v2017, 1
      %v2020 = vor.u32 %v2015, %v2019
      %v2021 = vrot.slane %v2013, 1
      %2022 = vrot.lane.b32.xlu0 %v1978, 64
      %v2023 = vpop.permute.xlu0 %2022
      %2024 = vrot.lane.b32.xlu0 %v1979, 64
      %v2025 = vpop.permute.xlu0 %2024
      %2026 = vrot.lane.b32.xlu0 %v1980, 64
      %v2027 = vpop.permute.xlu0 %2026
      %2028 = vrot.lane.b32.xlu0 %v1981, 64
      %v2029 = vpop.permute.xlu0 %2028
      %2030 = vrot.lane.b32.xlu0 %v1982, 64
      %v2031 = vpop.permute.xlu0 %2030
      %2032 = vrot.lane.b32.xlu0 %v1983, 64
      %v2033 = vpop.permute.xlu0 %2032
      %2034 = vrot.lane.b32.xlu0 %v1984, 64
      %v2035 = vpop.permute.xlu0 %2034
      %2036 = vrot.lane.b32.xlu0 %v2021, 64
      %v2037 = vpop.permute.xlu0 %2036
      %v2040 = vunpack.c.l.b16 %v1863
      %v2041 = vunpack.c.l.b16 %v1864
      %v2042 = vpack.c.b16 %v2041, %v2040
      %v2044 = vshrl.u32 %v2042, 16
      %v2046 = vshll.u32 %v2042, 16
      %v2048 = vrot.slane %v2046, 1
      %v2049 = vor.u32 %v2044, %v2048
      %2050 = vrot.lane.b32.xlu0 %v2020, 64
      %v2051 = vpop.permute.xlu0 %2050
      %2052 = vrot.lane.b32.xlu0 %v2049, 64
      %v2053 = vpop.permute.xlu0 %2052
      %v2054 = vrot.slane %v2042, 1
      %vm2055 = vcmask 523264
      %v2058 = vsel %vm2055, %v1845, %v1962
      %v2061 = vsel %vm2055, %v1847, %v1964
      %v2064 = vsel %vm2055, %v1849, %v1966
      %v2067 = vsel %vm2055, %v1851, %v1968
      %v2070 = vsel %vm2055, %v1853, %v1970
      %v2073 = vsel %vm2055, %v1855, %v1972
      %v2076 = vsel %vm2055, %v1857, %v1974
      %v2079 = vsel %vm2055, %v1859, %v1976
      %v2082 = vsel %vm2055, %v1977, %v1996
      %v2085 = vsel %vm2055, %v1978, %v1998
      %v2088 = vsel %vm2055, %v1979, %v2000
      %v2091 = vsel %vm2055, %v1980, %v2002
      %v2094 = vsel %vm2055, %v1981, %v2004
      %v2097 = vsel %vm2055, %v1982, %v2006
      %v2100 = vsel %vm2055, %v1983, %v2008
      %v2103 = vsel %vm2055, %v1984, %v2010
      %v2106 = vsel %vm2055, %v1918, %v2023
      %v2109 = vsel %vm2055, %v1925, %v2025
      %v2112 = vsel %vm2055, %v1932, %v2027
      %v2115 = vsel %vm2055, %v1939, %v2029
      %v2118 = vsel %vm2055, %v1946, %v2031
      %v2121 = vsel %vm2055, %v1953, %v2033
      %v2124 = vsel %vm2055, %v1960, %v2035
      %v2127 = vsel %vm2055, %v2020, %v2037
      %v2130 = vsel %vm2055, %v1861, %v2051
      %v2133 = vsel %vm2055, %v1863, %v2053
      %v2160 = vunpack.c.l.b16 %v2058
      %v2161 = vunpack.c.l.b16 %v2082
      %v2162 = vunpack.c.l.b16 %v2106
      %v2163 = vunpack.c.l.b16 %v2064
      %v2164 = vunpack.c.l.b16 %v1979
      %v2165 = vunpack.c.l.b16 %v2061
      %v2166 = vunpack.c.l.b16 %v2085
      %v2167 = vunpack.c.l.b16 %v2109
      %v2168 = vunpack.c.l.b16 %v2067
      %v2169 = vunpack.c.l.b16 %v1980
      %v2170 = vunpack.c.l.b16 %v2088
      %v2171 = vunpack.c.l.b16 %v2112
      %v2172 = vunpack.c.l.b16 %v2070
      %v2173 = vunpack.c.l.b16 %v1981
      %v2174 = vunpack.c.l.b16 %v2091
      %v2175 = vunpack.c.l.b16 %v2115
      %v2176 = vunpack.c.l.b16 %v2073
      %v2177 = vunpack.c.l.b16 %v1982
      %v2178 = vunpack.c.l.b16 %v2094
      %v2179 = vunpack.c.l.b16 %v2118
      %v2180 = vunpack.c.l.b16 %v2076
      %v2181 = vunpack.c.l.b16 %v1983
      %v2182 = vunpack.c.l.b16 %v2097
      %v2183 = vunpack.c.l.b16 %v2121
      %v2184 = vunpack.c.l.b16 %v2079
      %v2185 = vunpack.c.l.b16 %v1984
      %v2186 = vunpack.c.l.b16 %v2100
      %v2187 = vunpack.c.l.b16 %v2124
      %v2188 = vunpack.c.l.b16 %v2130
      %v2189 = vunpack.c.l.b16 %v2021
      %v2190 = vunpack.c.l.b16 %v2103
      %v2191 = vunpack.c.l.b16 %v2127
      %v2192 = vunpack.c.l.b16 %v2133
      %v2193 = vunpack.c.l.b16 %v2054
      %v2194 = vld [vmem:[%s3] sm:$0xf]
      %v2195 = vld [vmem:[%s3 + $0x4] sm:$0xf]
      %v2196 = vld [vmem:[%s3 + $0x8] sm:$0xf]
      %v2197 = vld [vmem:[%s3 + $0xc] sm:$0xf]
      %v2198 = vld [vmem:[%s3 + $0x10] sm:$0xf]
      %v2199 = vld [vmem:[%s3 + $0x14] sm:$0xf]
      %v2200 = vld [vmem:[%s3 + $0x18] sm:$0xf]
      %v2201 = vld [vmem:[%s3 + $0x1c] sm:$0xf]
      %v2202 = vld [vmem:[%s3 + $0x20] sm:$0xf]
      %v2203 = vld [vmem:[%s3 + $0x24] sm:$0xf]
      %v2204 = vld [vmem:[%s3 + $0x28] sm:$0xf]
      %v2205 = vld [vmem:[%s3 + $0x2c] sm:$0xf]
      %v2206 = vld [vmem:[%s3 + $0x30] sm:$0xf]
      %v2207 = vld [vmem:[%s3 + $0x34] sm:$0xf]
      %v2208 = vld [vmem:[%s3 + $0x38] sm:$0xf]
      %v2209 = vld [vmem:[%s3 + $0x3c] sm:$0xf]
      %v2210 = vld [vmem:[%s3 + $0x40] sm:$0xf]
      %v2211 = vld [vmem:[%s3 + $0x44] sm:$0xf]
      %v2212 = vld [vmem:[%s3 + $0x48] sm:$0xf]
      %v2213 = vld [vmem:[%s3 + $0x4c] sm:$0xf]
      %v2214 = vld [vmem:[%s3 + $0x50] sm:$0xf]
      %v2215 = vld [vmem:[%s3 + $0x54] sm:$0xf]
      %v2216 = vld [vmem:[%s3 + $0x58] sm:$0xf]
      %v2217 = vld [vmem:[%s3 + $0x5c] sm:$0xf]
      %v2218 = vld [vmem:[%s3 + $0x60] sm:$0xf]
      %v2219 = vld [vmem:[%s3 + $0x64] sm:$0xf]
      %v2220 = vld [vmem:[%s3 + $0x68] sm:$0xf]
      %v2221 = vld [vmem:[%s3 + $0x6c] sm:$0xf]
      %v2222 = vld [vmem:[%s3 + $0x70] sm:$0xf]
      %v2223 = vld [vmem:[%s3 + $0x74] sm:$0xf]
      %v2224 = vld [vmem:[%s3 + $0x78] sm:$0xf]
      %v2225 = vld [vmem:[%s3 + $0x7c] sm:$0xf]
      %v2226 = vld [vmem:[%s3 + $0x80] sm:$0xf]
      %v2227 = vld [vmem:[%s3 + $0x84] sm:$0xf]
      %v2228 = vld [vmem:[%s3 + $0x88] sm:$0xf]
      %v2229 = vld [vmem:[%s3 + $0x8c] sm:$0xf]
      %v2230 = vld [vmem:[%s3 + $0x90] sm:$0xf]
      %v2231 = vld [vmem:[%s3 + $0x94] sm:$0xf]
      %v2232 = vld [vmem:[%s3 + $0x98] sm:$0xf]
      %v2233 = vld [vmem:[%s3 + $0x9c] sm:$0xf]
      %v2234 = vld [vmem:[%s3 + $0xa0] sm:$0xf]
      %v2235 = vld [vmem:[%s3 + $0xa4] sm:$0xf]
      %v2236 = vld [vmem:[%s3 + $0xa8] sm:$0xf]
      %v2237 = vld [vmem:[%s3 + $0xac] sm:$0xf]
      %v2238 = vld [vmem:[%s3 + $0xb0] sm:$0xf]
      %v2239 = vld [vmem:[%s3 + $0xb4] sm:$0xf]
      %v2240 = vld [vmem:[%s3 + $0xb8] sm:$0xf]
      %v2241 = vld [vmem:[%s3 + $0xbc] sm:$0xf]
      %v2242 = vld [vmem:[%s3 + $0xc0] sm:$0xf]
      %v2243 = vld [vmem:[%s3 + $0xc4] sm:$0xf]
      %v2244 = vld [vmem:[%s3 + $0xc8] sm:$0xf]
      %v2245 = vld [vmem:[%s3 + $0xcc] sm:$0xf]
      %v2246 = vld [vmem:[%s3 + $0xd0] sm:$0xf]
      %v2247 = vld [vmem:[%s3 + $0xd4] sm:$0xf]
      %v2248 = vld [vmem:[%s3 + $0xd8] sm:$0xf]
      %v2249 = vld [vmem:[%s3 + $0xdc] sm:$0xf]
      %v2250 = vld [vmem:[%s3 + $0xe0] sm:$0xf]
      %v2251 = vld [vmem:[%s3 + $0xe4] sm:$0xf]
      %v2252 = vld [vmem:[%s3 + $0xe8] sm:$0xf]
      %v2253 = vld [vmem:[%s3 + $0xec] sm:$0xf]
      %v2254 = vld [vmem:[%s3 + $0xf0] sm:$0xf]
      %v2255 = vld [vmem:[%s3 + $0xf4] sm:$0xf]
      %v2256 = vld [vmem:[%s3 + $0xf8] sm:$0xf]
      %v2257 = vld [vmem:[%s3 + $0xfc] sm:$0xf]
      %v2258 = vld [vmem:[%s3 + $0x100] sm:$0xf]
      %v2259 = vld [vmem:[%s3 + $0x104] sm:$0xf]
      %v2260 = vld [vmem:[%s3 + $0x108] sm:$0xf]
      %v2261 = vld [vmem:[%s3 + $0x10c] sm:$0xf]
      %v2262 = vld [vmem:[%s3 + $0x110] sm:$0xf]
      %v2263 = vld [vmem:[%s3 + $0x114] sm:$0xf]
      %v2264 = vld [vmem:[%s3 + $0x118] sm:$0xf]
      %v2265 = vld [vmem:[%s3 + $0x11c] sm:$0xf]
      %v2266 = vld [vmem:[%s4] sm:$0x1]
      %v2268 = vperm.slane %v2266, 0
      %v2270 = vpack.c.b16 %v2165, %v2160
      %v2271 = vpack.c.b16 %v2166, %v2161
      %v2272 = vpack.c.b16 %v2167, %v2162
      %v2273 = vpack.c.b16 %v2168, %v2163
      %v2274 = vpack.c.b16 %v2169, %v2164
      %v2275 = vpack.c.b16 %v2174, %v2170
      %v2276 = vpack.c.b16 %v2175, %v2171
      %v2277 = vpack.c.b16 %v2176, %v2172
      %v2278 = vpack.c.b16 %v2177, %v2173
      %v2279 = vpack.c.b16 %v2182, %v2178
      %v2280 = vpack.c.b16 %v2183, %v2179
      %v2281 = vpack.c.b16 %v2184, %v2180
      %v2282 = vpack.c.b16 %v2185, %v2181
      %v2283 = vpack.c.b16 %v2190, %v2186
      %v2284 = vpack.c.b16 %v2191, %v2187
      %v2285 = vpack.c.b16 %v2192, %v2188
      %v2286 = vpack.c.b16 %v2193, %v2189
      %v2372 = vunpack.c.l.b16 %v2194
      %v2373 = vunpack.c.l.b16 %v2195
      %v2374 = vunpack.c.l.b16 %v2196
      %v2375 = vunpack.c.l.b16 %v2197
      %v2376 = vunpack.c.l.b16 %v2198
      %v2377 = vunpack.c.l.b16 %v2199
      %v2378 = vunpack.c.l.b16 %v2200
      %v2379 = vunpack.c.l.b16 %v2201
      %v2380 = vunpack.c.l.b16 %v2202
      %v2381 = vunpack.c.l.b16 %v2203
      %v2382 = vunpack.c.l.b16 %v2204
      %v2383 = vunpack.c.l.b16 %v2205
      %v2384 = vunpack.c.l.b16 %v2206
      %v2385 = vunpack.c.l.b16 %v2207
      %v2386 = vunpack.c.l.b16 %v2208
      %v2387 = vunpack.c.l.b16 %v2209
      %v2388 = vunpack.c.l.b16 %v2210
      %v2389 = vunpack.c.l.b16 %v2211
      %v2390 = vunpack.c.l.b16 %v2212
      %v2391 = vunpack.c.l.b16 %v2213
      %v2392 = vunpack.c.l.b16 %v2214
      %v2393 = vunpack.c.l.b16 %v2215
      %v2394 = vunpack.c.l.b16 %v2216
      %v2395 = vunpack.c.l.b16 %v2217
      %v2396 = vunpack.c.l.b16 %v2218
      %v2397 = vunpack.c.l.b16 %v2219
      %v2398 = vunpack.c.l.b16 %v2220
      %v2399 = vunpack.c.l.b16 %v2221
      %v2400 = vunpack.c.l.b16 %v2222
      %v2401 = vunpack.c.l.b16 %v2223
      %v2402 = vunpack.c.l.b16 %v2224
      %v2403 = vunpack.c.l.b16 %v2225
      %v2404 = vunpack.c.l.b16 %v2226
      %v2405 = vunpack.c.l.b16 %v2227
      %v2406 = vunpack.c.l.b16 %v2228
      %v2407 = vunpack.c.l.b16 %v2229
      %v2408 = vunpack.c.l.b16 %v2230
      %v2409 = vunpack.c.l.b16 %v2231
      %v2410 = vunpack.c.l.b16 %v2232
      %v2411 = vunpack.c.l.b16 %v2233
      %v2412 = vunpack.c.l.b16 %v2234
      %v2413 = vunpack.c.l.b16 %v2235
      %v2414 = vunpack.c.l.b16 %v2236
      %v2415 = vunpack.c.l.b16 %v2237
      %v2416 = vunpack.c.l.b16 %v2238
      %v2417 = vunpack.c.l.b16 %v2239
      %v2418 = vunpack.c.l.b16 %v2240
      %v2419 = vunpack.c.l.b16 %v2241
      %v2420 = vunpack.c.l.b16 %v2242
      %v2421 = vunpack.c.l.b16 %v2243
      %v2422 = vunpack.c.l.b16 %v2244
      %v2423 = vunpack.c.l.b16 %v2245
      %v2424 = vunpack.c.l.b16 %v2246
      %v2425 = vunpack.c.l.b16 %v2247
      %v2426 = vunpack.c.l.b16 %v2248
      %v2427 = vunpack.c.l.b16 %v2249
      %v2428 = vunpack.c.l.b16 %v2250
      %v2429 = vunpack.c.l.b16 %v2251
      %v2430 = vunpack.c.l.b16 %v2252
      %v2431 = vunpack.c.l.b16 %v2253
      %v2432 = vunpack.c.l.b16 %v2254
      %v2433 = vunpack.c.l.b16 %v2255
      %v2434 = vunpack.c.l.b16 %v2256
      %v2435 = vunpack.c.l.b16 %v2257
      %v2436 = vunpack.c.l.b16 %v2258
      %v2437 = vunpack.c.l.b16 %v2259
      %v2438 = vunpack.c.l.b16 %v2260
      %v2439 = vunpack.c.l.b16 %v2261
      %v2440 = vunpack.c.l.b16 %v2262
      %v2441 = vunpack.c.l.b16 %v2263
      %v2442 = vunpack.c.l.b16 %v2264
      %v2443 = vunpack.c.l.b16 %v2265
      %v2444 = vpack.c.b16 %v2373, %v2372
      %v2445 = vpack.c.b16 %v2375, %v2374
      %v2446 = vpack.c.b16 %v2377, %v2376
      %v2447 = vpack.c.b16 %v2379, %v2378
      %v2448 = vpack.c.b16 %v2381, %v2380
      %v2449 = vpack.c.b16 %v2383, %v2382
      %v2450 = vpack.c.b16 %v2385, %v2384
      %v2451 = vpack.c.b16 %v2387, %v2386
      %v2452 = vpack.c.b16 %v2389, %v2388
      %v2453 = vpack.c.b16 %v2391, %v2390
      %v2454 = vpack.c.b16 %v2393, %v2392
      %v2455 = vpack.c.b16 %v2395, %v2394
      %v2456 = vpack.c.b16 %v2397, %v2396
      %v2457 = vpack.c.b16 %v2399, %v2398
      %v2458 = vpack.c.b16 %v2401, %v2400
      %v2459 = vpack.c.b16 %v2403, %v2402
      %v2460 = vpack.c.b16 %v2405, %v2404
      %v2461 = vpack.c.b16 %v2407, %v2406
      %v2462 = vpack.c.b16 %v2409, %v2408
      %v2463 = vpack.c.b16 %v2411, %v2410
      %v2464 = vpack.c.b16 %v2413, %v2412
      %v2465 = vpack.c.b16 %v2415, %v2414
      %v2466 = vpack.c.b16 %v2417, %v2416
      %v2467 = vpack.c.b16 %v2419, %v2418
      %v2468 = vpack.c.b16 %v2421, %v2420
      %v2469 = vpack.c.b16 %v2423, %v2422
      %v2470 = vpack.c.b16 %v2425, %v2424
      %v2471 = vpack.c.b16 %v2427, %v2426
      %v2472 = vpack.c.b16 %v2429, %v2428
      %v2473 = vpack.c.b16 %v2431, %v2430
      %v2474 = vpack.c.b16 %v2433, %v2432
      %v2475 = vpack.c.b16 %v2435, %v2434
      %v2476 = vpack.c.b16 %v2437, %v2436
      %v2477 = vpack.c.b16 %v2439, %v2438
      %v2478 = vpack.c.b16 %v2441, %v2440
      %v2479 = vpack.c.b16 %v2443, %v2442
      %v2517 = vsel %vm2055, %v2274, 0
      %v2520 = vsel %vm2055, %v2278, 0
      %v2523 = vsel %vm2055, %v2282, 0
      %v2526 = vsel %vm2055, %v2286, 0
      %2528 = vmatpush.bf16.msra.mxu0 %v2451
      %2529 = vmatpush.bf16.msra.mxu0 %v2450
      %2530 = vmatpush.bf16.msra.mxu0 %v2449
      %2531 = vmatpush.bf16.msra.mxu0 %v2448
      %2532 = vmatpush.bf16.msra.mxu0 %v2447
      %2533 = vmatpush.bf16.msra.mxu0 %v2446
      %2534 = vmatpush.bf16.msra.mxu0 %v2445
      %2535 = vmatpush.bf16.msra.mxu0 %v2444
      %2536 = vmatmul.bf16.gmra.mxu0 %v2270
      %v2537 = vpop.f32.mrf.mxu0
      %v2538 = vadd.f32 %v2268, %v2537
      %v2539 = vpop.f32.mrf.mxu0
      %v2540 = vadd.f32 %v2268, %v2539
      %2541 = vmatmul.bf16.gmra.mxu0 %v2273
      %v2542 = vpop.f32.mrf.mxu0
      %v2543 = vadd.f32 %v2268, %v2542
      %v2544 = vpop.f32.mrf.mxu0
      %v2545 = vadd.f32 %v2268, %v2544
      %2546 = vmatmul.bf16.gmra.mxu0 %v2277
      %v2547 = vpop.f32.mrf.mxu0
      %v2548 = vadd.f32 %v2268, %v2547
      %v2549 = vpop.f32.mrf.mxu0
      %v2550 = vadd.f32 %v2268, %v2549
      %2551 = vmatmul.bf16.gmra.mxu0 %v2281
      %v2552 = vpop.f32.mrf.mxu0
      %v2553 = vadd.f32 %v2268, %v2552
      %v2554 = vpop.f32.mrf.mxu0
      %v2555 = vadd.f32 %v2268, %v2554
      %2556 = vdwg.mxu0
      %2557 = vmatpush.bf16.msra.mxu0 %v2459
      %2558 = vmatpush.bf16.msra.mxu0 %v2458
      %2559 = vmatpush.bf16.msra.mxu0 %v2457
      %2560 = vmatpush.bf16.msra.mxu0 %v2456
      %2561 = vmatpush.bf16.msra.mxu0 %v2455
      %2562 = vmatpush.bf16.msra.mxu0 %v2454
      %2563 = vmatpush.bf16.msra.mxu0 %v2453
      %2564 = vmatpush.bf16.msra.mxu0 %v2452
      %2565 = vmatmul.bf16.gmra.mxu0 %v2271
      %v2566 = vpop.f32.mrf.mxu0
      %v2567 = vadd.f32 %v2538, %v2566
      %v2568 = vpop.f32.mrf.mxu0
      %v2569 = vadd.f32 %v2540, %v2568
      %2570 = vmatmul.bf16.gmra.mxu0 %v2275
      %v2571 = vpop.f32.mrf.mxu0
      %v2572 = vadd.f32 %v2543, %v2571
      %v2573 = vpop.f32.mrf.mxu0
      %v2574 = vadd.f32 %v2545, %v2573
      %2575 = vmatmul.bf16.gmra.mxu0 %v2279
      %v2576 = vpop.f32.mrf.mxu0
      %v2577 = vadd.f32 %v2548, %v2576
      %v2578 = vpop.f32.mrf.mxu0
      %v2579 = vadd.f32 %v2550, %v2578
      %2580 = vmatmul.bf16.gmra.mxu0 %v2283
      %v2581 = vpop.f32.mrf.mxu0
      %v2582 = vadd.f32 %v2553, %v2581
      %v2583 = vpop.f32.mrf.mxu0
      %v2584 = vadd.f32 %v2555, %v2583
      %2585 = vdwg.mxu0
      %2586 = vmatpush.bf16.msra.mxu0 %v2467
      %2587 = vmatpush.bf16.msra.mxu0 %v2466
      %2588 = vmatpush.bf16.msra.mxu0 %v2465
      %2589 = vmatpush.bf16.msra.mxu0 %v2464
      %2590 = vmatpush.bf16.msra.mxu0 %v2463
      %2591 = vmatpush.bf16.msra.mxu0 %v2462
      %2592 = vmatpush.bf16.msra.mxu0 %v2461
      %2593 = vmatpush.bf16.msra.mxu0 %v2460
      %2594 = vmatmul.bf16.gmra.mxu0 %v2272
      %v2595 = vpop.f32.mrf.mxu0
      %v2596 = vadd.f32 %v2567, %v2595
      %v2597 = vpop.f32.mrf.mxu0
      %v2598 = vadd.f32 %v2569, %v2597
      %2599 = vmatmul.bf16.gmra.mxu0 %v2276
      %v2600 = vpop.f32.mrf.mxu0
      %v2601 = vadd.f32 %v2572, %v2600
      %v2602 = vpop.f32.mrf.mxu0
      %v2603 = vadd.f32 %v2574, %v2602
      %2604 = vmatmul.bf16.gmra.mxu0 %v2280
      %v2605 = vpop.f32.mrf.mxu0
      %v2606 = vadd.f32 %v2577, %v2605
      %v2607 = vpop.f32.mrf.mxu0
      %v2608 = vadd.f32 %v2579, %v2607
      %2609 = vmatmul.bf16.gmra.mxu0 %v2284
      %v2610 = vpop.f32.mrf.mxu0
      %v2611 = vadd.f32 %v2582, %v2610
      %v2612 = vpop.f32.mrf.mxu0
      %v2613 = vadd.f32 %v2584, %v2612
      %2614 = vdwg.mxu0
      %2615 = vmatpush.bf16.msra.mxu0 %v2475
      %2616 = vmatpush.bf16.msra.mxu0 %v2474
      %2617 = vmatpush.bf16.msra.mxu0 %v2473
      %2618 = vmatpush.bf16.msra.mxu0 %v2472
      %2619 = vmatpush.bf16.msra.mxu0 %v2471
      %2620 = vmatpush.bf16.msra.mxu0 %v2470
      %2621 = vmatpush.bf16.msra.mxu0 %v2469
      %2622 = vmatpush.bf16.msra.mxu0 %v2468
      %2623 = vmatmul.bf16.gmra.mxu0 %v2273
      %v2624 = vpop.f32.mrf.mxu0
      %v2625 = vadd.f32 %v2596, %v2624
      %v2626 = vpop.f32.mrf.mxu0
      %v2627 = vadd.f32 %v2598, %v2626
      %2628 = vmatmul.bf16.gmra.mxu0 %v2277
      %v2629 = vpop.f32.mrf.mxu0
      %v2630 = vadd.f32 %v2601, %v2629
      %v2631 = vpop.f32.mrf.mxu0
      %v2632 = vadd.f32 %v2603, %v2631
      %2633 = vmatmul.bf16.gmra.mxu0 %v2281
      %v2634 = vpop.f32.mrf.mxu0
      %v2635 = vadd.f32 %v2606, %v2634
      %v2636 = vpop.f32.mrf.mxu0
      %v2637 = vadd.f32 %v2608, %v2636
      %2638 = vmatmul.bf16.gmra.mxu0 %v2285
      %v2639 = vpop.f32.mrf.mxu0
      %v2640 = vadd.f32 %v2611, %v2639
      %v2641 = vpop.f32.mrf.mxu0
      %v2642 = vadd.f32 %v2613, %v2641
      %2643 = vdwg.mxu0
      %2644 = vmatpush.bf16.msra.mxu0 0
      %2645 = vmatpush.bf16.msra.mxu0 0
      %2646 = vmatpush.bf16.msra.mxu0 0
      %2647 = vmatpush.bf16.msra.mxu0 0
      %2648 = vmatpush.bf16.msra.mxu0 %v2479
      %2649 = vmatpush.bf16.msra.mxu0 %v2478
      %2650 = vmatpush.bf16.msra.mxu0 %v2477
      %2651 = vmatpush.bf16.msra.mxu0 %v2476
      %2652 = vmatmul.bf16.gmra.mxu0 %v2517
      %v2653 = vpop.f32.mrf.mxu0
      %v2654 = vadd.f32 %v2625, %v2653
      %v2655 = vpop.f32.mrf.mxu0
      %v2656 = vadd.f32 %v2627, %v2655
      %2657 = vmatmul.bf16.gmra.mxu0 %v2520
      %v2658 = vpop.f32.mrf.mxu0
      %v2659 = vadd.f32 %v2630, %v2658
      %v2660 = vpop.f32.mrf.mxu0
      %v2661 = vadd.f32 %v2632, %v2660
      %2662 = vmatmul.bf16.gmra.mxu0 %v2523
      %v2663 = vpop.f32.mrf.mxu0
      %v2664 = vadd.f32 %v2635, %v2663
      %v2665 = vpop.f32.mrf.mxu0
      %v2666 = vadd.f32 %v2637, %v2665
      %2667 = vmatmul.bf16.gmra.mxu0 %v2526
      %v2668 = vpop.f32.mrf.mxu0
      %v2669 = vadd.f32 %v2640, %v2668
      %v2670 = vpop.f32.mrf.mxu0
      %v2671 = vadd.f32 %v2642, %v2670
      %2672 = vdwg.mxu0
      %v2673 = vmax.f32 %v2654, 0.0
      %v2674 = vmax.f32 %v2656, 0.0
      %v2675 = vmax.f32 %v2659, 0.0
      %v2676 = vmax.f32 %v2661, 0.0
      %v2677 = vmax.f32 %v2664, 0.0
      %v2678 = vmax.f32 %v2666, 0.0
      %v2679 = vmax.f32 %v2669, 0.0
      %v2680 = vmax.f32 %v2671, 0.0
      %v2689 = vrot.slane %v2673, 2
      %v2690 = vrot.slane %v2673, 4
      %v2691 = vrot.slane %v2673, 6
      %v2692 = vrot.slane %v2674, 2
      %v2693 = vrot.slane %v2674, 4
      %v2694 = vrot.slane %v2674, 6
      %v2695 = vrot.slane %v2675, 2
      %v2696 = vrot.slane %v2675, 4
      %v2697 = vrot.slane %v2675, 6
      %v2698 = vrot.slane %v2676, 2
      %v2699 = vrot.slane %v2676, 4
      %v2700 = vrot.slane %v2676, 6
      %v2701 = vrot.slane %v2677, 2
      %v2702 = vrot.slane %v2677, 4
      %v2703 = vrot.slane %v2677, 6
      %v2704 = vrot.slane %v2678, 2
      %v2705 = vrot.slane %v2678, 4
      %v2706 = vrot.slane %v2678, 6
      %v2707 = vrot.slane %v2679, 2
      %v2708 = vrot.slane %v2679, 4
      %v2709 = vrot.slane %v2679, 6
      %v2710 = vrot.slane %v2680, 2
      %v2711 = vrot.slane %v2680, 4
      %v2712 = vrot.slane %v2680, 6
      %v2737 = vrot.slane %v2673, 7
      %v2738 = vrot.slane %v2737, 2
      %v2739 = vrot.slane %v2689, 7
      %v2740 = vrot.slane %v2739, 2
      %v2741 = vrot.slane %v2690, 7
      %v2742 = vrot.slane %v2741, 2
      %v2743 = vrot.slane %v2691, 7
      %v2744 = vrot.slane %v2743, 2
      %v2745 = vrot.slane %v2674, 7
      %v2746 = vrot.slane %v2745, 2
      %v2747 = vrot.slane %v2692, 7
      %v2748 = vrot.slane %v2747, 2
      %v2749 = vrot.slane %v2693, 7
      %v2750 = vrot.slane %v2749, 2
      %v2751 = vrot.slane %v2694, 7
      %v2752 = vrot.slane %v2751, 2
      %v2753 = vrot.slane %v2675, 7
      %v2754 = vrot.slane %v2753, 2
      %v2755 = vrot.slane %v2695, 7
      %v2756 = vrot.slane %v2755, 2
      %v2757 = vrot.slane %v2696, 7
      %v2758 = vrot.slane %v2757, 2
      %v2759 = vrot.slane %v2697, 7
      %v2760 = vrot.slane %v2759, 2
      %v2761 = vrot.slane %v2676, 7
      %v2762 = vrot.slane %v2761, 2
      %v2763 = vrot.slane %v2698, 7
      %v2764 = vrot.slane %v2763, 2
      %v2765 = vrot.slane %v2699, 7
      %v2766 = vrot.slane %v2765, 2
      %v2767 = vrot.slane %v2700, 7
      %v2768 = vrot.slane %v2767, 2
      %v2769 = vrot.slane %v2677, 7
      %v2770 = vrot.slane %v2769, 2
      %v2771 = vrot.slane %v2701, 7
      %v2772 = vrot.slane %v2771, 2
      %v2773 = vrot.slane %v2702, 7
      %v2774 = vrot.slane %v2773, 2
      %v2775 = vrot.slane %v2703, 7
      %v2776 = vrot.slane %v2775, 2
      %v2777 = vrot.slane %v2678, 7
      %v2778 = vrot.slane %v2777, 2
      %v2779 = vrot.slane %v2704, 7
      %v2780 = vrot.slane %v2779, 2
      %v2781 = vrot.slane %v2705, 7
      %v2782 = vrot.slane %v2781, 2
      %v2783 = vrot.slane %v2706, 7
      %v2784 = vrot.slane %v2783, 2
      %v2785 = vrot.slane %v2679, 7
      %v2786 = vrot.slane %v2785, 2
      %v2787 = vrot.slane %v2707, 7
      %v2788 = vrot.slane %v2787, 2
      %v2789 = vrot.slane %v2708, 7
      %v2790 = vrot.slane %v2789, 2
      %v2791 = vrot.slane %v2709, 7
      %v2792 = vrot.slane %v2791, 2
      %v2793 = vrot.slane %v2680, 7
      %v2794 = vrot.slane %v2793, 2
      %v2795 = vrot.slane %v2710, 7
      %v2796 = vrot.slane %v2795, 2
      %v2797 = vrot.slane %v2711, 7
      %v2798 = vrot.slane %v2797, 2
      %v2799 = vrot.slane %v2712, 7
      %v2800 = vrot.slane %v2799, 2
      %v2833 = vmax.f32 %v2673, %v2738
      %v2834 = vmax.f32 %v2689, %v2740
      %v2835 = vmax.f32 %v2690, %v2742
      %v2836 = vmax.f32 %v2691, %v2744
      %v2837 = vmax.f32 %v2674, %v2746
      %v2838 = vmax.f32 %v2692, %v2748
      %v2839 = vmax.f32 %v2693, %v2750
      %v2840 = vmax.f32 %v2694, %v2752
      %v2841 = vmax.f32 %v2675, %v2754
      %v2842 = vmax.f32 %v2695, %v2756
      %v2843 = vmax.f32 %v2696, %v2758
      %v2844 = vmax.f32 %v2697, %v2760
      %v2845 = vmax.f32 %v2676, %v2762
      %v2846 = vmax.f32 %v2698, %v2764
      %v2847 = vmax.f32 %v2699, %v2766
      %v2848 = vmax.f32 %v2700, %v2768
      %v2849 = vmax.f32 %v2677, %v2770
      %v2850 = vmax.f32 %v2701, %v2772
      %v2851 = vmax.f32 %v2702, %v2774
      %v2852 = vmax.f32 %v2703, %v2776
      %v2853 = vmax.f32 %v2678, %v2778
      %v2854 = vmax.f32 %v2704, %v2780
      %v2855 = vmax.f32 %v2705, %v2782
      %v2856 = vmax.f32 %v2706, %v2784
      %v2857 = vmax.f32 %v2679, %v2786
      %v2858 = vmax.f32 %v2707, %v2788
      %v2859 = vmax.f32 %v2708, %v2790
      %v2860 = vmax.f32 %v2709, %v2792
      %v2861 = vmax.f32 %v2680, %v2794
      %v2862 = vmax.f32 %v2710, %v2796
      %v2863 = vmax.f32 %v2711, %v2798
      %v2864 = vmax.f32 %v2712, %v2800
      %v2865 = vmax.f32 %v2833, %v2837
      %v2866 = vmax.f32 %v2834, %v2838
      %v2867 = vmax.f32 %v2835, %v2839
      %v2868 = vmax.f32 %v2836, %v2840
      %v2869 = vmax.f32 %v2841, %v2845
      %v2870 = vmax.f32 %v2842, %v2846
      %v2871 = vmax.f32 %v2843, %v2847
      %v2872 = vmax.f32 %v2844, %v2848
      %v2873 = vmax.f32 %v2849, %v2853
      %v2874 = vmax.f32 %v2850, %v2854
      %v2875 = vmax.f32 %v2851, %v2855
      %v2876 = vmax.f32 %v2852, %v2856
      %v2877 = vmax.f32 %v2857, %v2861
      %v2878 = vmax.f32 %v2858, %v2862
      %v2879 = vmax.f32 %v2859, %v2863
      %v2880 = vmax.f32 %v2860, %v2864
      %v2897 = vperm.slane %v2865, 0
      %v2898 = vperm.slane %v2866, 0
      %v2899 = vperm.slane %v2867, 0
      %v2900 = vperm.slane %v2868, 0
      %v2901 = vperm.slane %v2869, 0
      %v2902 = vperm.slane %v2870, 0
      %v2903 = vperm.slane %v2871, 0
      %v2904 = vperm.slane %v2872, 0
      %v2905 = vperm.slane %v2873, 0
      %v2906 = vperm.slane %v2874, 0
      %v2907 = vperm.slane %v2875, 0
      %v2908 = vperm.slane %v2876, 0
      %v2909 = vperm.slane %v2877, 0
      %v2910 = vperm.slane %v2878, 0
      %v2911 = vperm.slane %v2879, 0
      %v2912 = vperm.slane %v2880, 0
      %vm2913 = vcmask 1041409
      %v2914 = vsel %vm2913, %v2898, %v2897
      %v2915 = vsel %vm1654, %v2899, %v2914
      %v2916 = vsel %vm1657, %v2900, %v2915
      %v2917 = vsel %vm1660, %v2901, %v2916
      %v2918 = vsel %vm1663, %v2902, %v2917
      %v2919 = vsel %vm1666, %v2903, %v2918
      %v2920 = vsel %vm1669, %v2904, %v2919
      %v2921 = vsel %vm2913, %v2906, %v2905
      %v2922 = vsel %vm1654, %v2907, %v2921
      %v2923 = vsel %vm1657, %v2908, %v2922
      %v2924 = vsel %vm1660, %v2909, %v2923
      %v2925 = vsel %vm1663, %v2910, %v2924
      %v2926 = vsel %vm1666, %v2911, %v2925
      %v2927 = vsel %vm1669, %v2912, %v2926
      %v2930 = vadd.f32 %v2920, %v2927
      %v2931 = vrot.slane %v2930, 4
      %v2932 = vadd.f32 %v2930, %v2931
      %v2933 = vrot.slane %v2932, 2
      %v2934 = vadd.f32 %v2932, %v2933
      %v2935 = vrot.slane %v2934, 1
      %v2936 = vadd.f32 %v2934, %v2935
      %v2937 = vmul.f32 %v2936, 0.0625
      %v2938 = vpack.c.bf16 %v2937, %v2937
      %v2939 = vld [vmem:[%s5] sm:$0xff]
      %v2940 = vld [vmem:[%s5 + $0x8] sm:$0xff]
      %v2941 = vld [vmem:[%s5 + $0x10] sm:$0xff]
      %v2942 = vld [vmem:[%s5 + $0x18] sm:$0xff]
      %v2943 = vld [vmem:[%s5 + $0x20] sm:$0xff]
      %v2944 = vld [vmem:[%s5 + $0x28] sm:$0xff]
      %v2945 = vld [vmem:[%s5 + $0x30] sm:$0xff]
      %v2946 = vld [vmem:[%s5 + $0x38] sm:$0xff]
      %v2947 = vld [vmem:[%s5 + $0x40] sm:$0xff]
      %v2948 = vld [vmem:[%s5 + $0x48] sm:$0xff]
      %v2949 = vld [vmem:[%s5 + $0x50] sm:$0xff]
      %v2950 = vld [vmem:[%s5 + $0x58] sm:$0xff]
      %v2951 = vld [vmem:[%s5 + $0x60] sm:$0xff]
      %v2952 = vld [vmem:[%s5 + $0x68] sm:$0xff]
      %v2953 = vld [vmem:[%s5 + $0x70] sm:$0xff]
      %v2954 = vld [vmem:[%s5 + $0x78] sm:$0xff]
      %v2955 = vld [vmem:[%s6] sm:$0x3]
      %v2972 = vunpack.c.l.b16 %v2939
      %v2973 = vunpack.c.h.b16 %v2939
      %v2974 = vunpack.c.l.b16 %v2940
      %v2975 = vunpack.c.h.b16 %v2940
      %v2976 = vunpack.c.l.b16 %v2941
      %v2977 = vunpack.c.h.b16 %v2941
      %v2978 = vunpack.c.l.b16 %v2942
      %v2979 = vunpack.c.h.b16 %v2942
      %v2980 = vunpack.c.l.b16 %v2943
      %v2981 = vunpack.c.h.b16 %v2943
      %v2982 = vunpack.c.l.b16 %v2944
      %v2983 = vunpack.c.h.b16 %v2944
      %v2984 = vunpack.c.l.b16 %v2945
      %v2985 = vunpack.c.h.b16 %v2945
      %v2986 = vunpack.c.l.b16 %v2946
      %v2987 = vunpack.c.h.b16 %v2946
      %v2988 = vunpack.c.l.b16 %v2947
      %v2989 = vunpack.c.h.b16 %v2947
      %v2990 = vunpack.c.l.b16 %v2948
      %v2991 = vunpack.c.h.b16 %v2948
      %v2992 = vunpack.c.l.b16 %v2949
      %v2993 = vunpack.c.h.b16 %v2949
      %v2994 = vunpack.c.l.b16 %v2950
      %v2995 = vunpack.c.h.b16 %v2950
      %v2996 = vunpack.c.l.b16 %v2951
      %v2997 = vunpack.c.h.b16 %v2951
      %v2998 = vunpack.c.l.b16 %v2952
      %v2999 = vunpack.c.h.b16 %v2952
      %v3000 = vunpack.c.l.b16 %v2953
      %v3001 = vunpack.c.h.b16 %v2953
      %v3002 = vunpack.c.l.b16 %v2954
      %v3003 = vunpack.c.h.b16 %v2954
      %v3004 = vpack.c.b16 %v2974, %v2972
      %v3005 = vpack.c.b16 %v2975, %v2973
      %v3006 = vpack.c.b16 %v2978, %v2976
      %v3007 = vpack.c.b16 %v2979, %v2977
      %v3008 = vpack.c.b16 %v2982, %v2980
      %v3009 = vpack.c.b16 %v2983, %v2981
      %v3010 = vpack.c.b16 %v2986, %v2984
      %v3011 = vpack.c.b16 %v2987, %v2985
      %v3012 = vpack.c.b16 %v2990, %v2988
      %v3013 = vpack.c.b16 %v2991, %v2989
      %v3014 = vpack.c.b16 %v2994, %v2992
      %v3015 = vpack.c.b16 %v2995, %v2993
      %v3016 = vpack.c.b16 %v2998, %v2996
      %v3017 = vpack.c.b16 %v2999, %v2997
      %v3018 = vpack.c.b16 %v3002, %v3000
      %v3019 = vpack.c.b16 %v3003, %v3001
      %v3037 = vperm.slane %v2955, 0
      %v3038 = vperm.slane %v2955, 1
      %3041 = vmatpush.bf16.msra.mxu0 %v3018
      %3042 = vmatpush.bf16.msra.mxu0 %v3016
      %3043 = vmatpush.bf16.msra.mxu0 %v3014
      %3044 = vmatpush.bf16.msra.mxu0 %v3012
      %3045 = vmatpush.bf16.msra.mxu0 %v3010
      %3046 = vmatpush.bf16.msra.mxu0 %v3008
      %3047 = vmatpush.bf16.msra.mxu0 %v3006
      %3048 = vmatpush.bf16.msra.mxu0 %v3004
      %3049 = vmatmul.bf16.gmra.mxu0 %v2938
      %v3050 = vpop.f32.mrf.mxu0
      %v3051 = vadd.f32 %v3037, %v3050
      %v3052 = vpop.f32.mrf.mxu0
      %3053 = vdwg.mxu0
      %3054 = vmatpush.bf16.msra.mxu0 %v3019
      %3055 = vmatpush.bf16.msra.mxu0 %v3017
      %3056 = vmatpush.bf16.msra.mxu0 %v3015
      %3057 = vmatpush.bf16.msra.mxu0 %v3013
      %3058 = vmatpush.bf16.msra.mxu0 %v3011
      %3059 = vmatpush.bf16.msra.mxu0 %v3009
      %3060 = vmatpush.bf16.msra.mxu0 %v3007
      %3061 = vmatpush.bf16.msra.mxu0 %v3005
      %3062 = vmatmul.bf16.gmra.mxu0 %v2938
      %v3063 = vpop.f32.mrf.mxu0
      %v3064 = vadd.f32 %v3038, %v3063
      %v3065 = vpop.f32.mrf.mxu0
      %3066 = vdwg.mxu0
      %v3067 = vmax.f32 %v3051, 0.0
      %v3068 = vmax.f32 %v3064, 0.0
      %v3071 = vrot.slane %v3068, 7
      %vm3072 = vcmask 1040384
      %v3073 = vsel %vm3072, %v3067, %v3071
      %v3075 = vlaneseq
      %vm3076 = vcmp.ge.s32.totalorder %v3075, 0
      %vm3077 = vcmp.lt.s32.totalorder %v3075, 256
      %vm3078 = vmand %vm3076, %vm3077
      %3079 = vst.msk [vmem:[%s278] sm:$0x3] %vm3078, %v3073
      %p3080 = scmp.lt.s32.totalorder %s18, 1
      %s3081 = scalar_select %p3080, %s18, 1
      %s3082 = smul.addr %s3081, 2
      %s3083 = scalar_lea.vmem %s7, %s3082
      // Predicated region
      $region49: #{custom_net_forward.1} parent=47 // pred_check
        %p3084 = pneg %p188
      $region50: #{custom_net_forward.1} parent=47 // pred_check_branch
        %3086 = sbr.rel (%p3084) target = $region52
      $region51: #{custom_net_forward.1} parent=47 // pred_region
        _
      $region52: #{custom_net_forward.1} parent=47 // pred_fallthru
        _
    $region48: #{custom_net_forward.1} parent=5 // pred_fallthru
      _
    %p3087 = scmp.le.s32.totalorder 2, %s13
    // Predicated region
    $region53: #{custom_net_forward.1} parent=5 // pred_check
      %p3088 = pneg %p3087
    $region54: #{custom_net_forward.1} parent=5 // pred_check_branch
      %3090 = sbr.rel (%p3088) target = $region56
    $region55: #{custom_net_forward.1} parent=5 // pred_region
      %s3091 = ssub.s32 %s13, 2
      // Predicated region
      $region57: #{custom_net_forward.1} parent=55 // pred_check
        %p3092 = pneg %p194
      $region58: #{custom_net_forward.1} parent=55 // pred_check_branch
        %3094 = sbr.rel (%p3092) target = $region60
      $region59: #{custom_net_forward.1} parent=55 // pred_region
        %p3095 = scmp.lt.s32.totalorder %s19, 1
        %s3096 = scalar_select %p3095, %s19, 1
        %s3097 = smul.addr %s3096, 2
        %s3098 = scalar_lea.vmem %s7, %s3097
      $region60: #{custom_net_forward.1} parent=55 // pred_fallthru
        _
    $region56: #{custom_net_forward.1} parent=5 // pred_fallthru
      _
  $region6: #{custom_net_forward.1} parent=0 // loop_footer
    %s17 = sadd.s32 1, %s13
  $region7: #{custom_net_forward.1} parent=0 // loop_footer_branch
    %12 = sbr.rel target = $region3
  $region8: #{custom_net_forward.1} parent=0 // loop_exit
    _

</llo_original>
